<compile_context>
chip_gen: v7x
topology: tpu7x:2x2x1
jax: 0.10.0
libtpu: 0.0.40
codegen_flags: <defaults>
</compile_context>

<pallas_src>
import jax
import jax.numpy as jnp
from jax.experimental import pallas as pl
from jax.experimental.pallas import tpu as pltpu

LATENT_DIM = 1
H1 = 512
H2 = 1024
OUT = 1
LEAK = 0.01


def _round_up(n, m):
    return ((n + m - 1) // m) * m


def _leaky_relu(x, slope=LEAK):
    return jnp.where(x >= 0, x, slope * x)


def discriminator_kernel(x_ref, w1_ref, b1_ref, w2_ref, b2_ref, w3_ref, b3_ref,
                         o_ref):
    """Grid = (batch_tile i [parallel],).  All three layers fused per tile."""
    # ---- Layer 1: K = latentDim is tiny (1), so do the outer product on the
    # VPU instead of pushing a K=1 dot through the MXU.
    h1 = b1_ref[...]                                     # (1, 512)
    for l in range(LATENT_DIM):                          # static unroll (L == 1)
        h1 = h1 + x_ref[:, l:l + 1] * w1_ref[l:l + 1, :]
    h1 = _leaky_relu(h1)                                 # (TB, 512) f32

    # ---- Layer 2: (TB, 512) @ (512, 1024) on the MXU, bf16 in / f32 acc.
    h2 = jnp.dot(h1.astype(jnp.bfloat16), w2_ref[...],
                 preferred_element_type=jnp.float32)
    h2 = _leaky_relu(h2 + b2_ref[...])                   # (TB, 1024) f32

    # ---- Layer 3 (N = 1): VPU multiply + XLU lane reduction, scalar bias
    # from SMEM, sigmoid via EUP exp.
    z = jnp.sum(h2 * w3_ref[...], axis=-1, keepdims=True) + b3_ref[0, 0]
    o_ref[...] = (1.0 / (1.0 + jnp.exp(-z))).astype(o_ref.dtype)


def discriminator_forward(x, params, *, batch_tile=128):
    """params = (w1 f32 (1,512), b1 (1,512), w2 bf16 (512,1024), b2 (1,1024),
                 w3_row f32 (1,1024), b3 (1,1)) — see prepare_params()."""
    w1, b1, w2, b2, w3_row, b3 = params
    B, L = x.shape
    assert L == LATENT_DIM

    # One-time conversions normally happen in prepare_params; guard anyway.
    if w2.dtype != jnp.bfloat16:
        w2 = w2.astype(jnp.bfloat16)
    if w3_row.shape != (1, H2):
        w3_row = w3_row.reshape(1, H2)

    # Batch tiling: pad to a multiple of the batch tile (>= 8 for sublanes).
    tb = min(batch_tile, _round_up(B, 8))
    b_pad = _round_up(B, tb)
    if b_pad != B:
        x = jnp.pad(x, ((0, b_pad - B), (0, 0)))

    grid = (b_pad // tb,)

    out = pl.pallas_call(
        discriminator_kernel,
        out_shape=jax.ShapeDtypeStruct((b_pad, OUT), jnp.float32),
        grid_spec=pltpu.PrefetchScalarGridSpec(
            num_scalar_prefetch=0,
            grid=grid,
            in_specs=[
                pl.BlockSpec((tb, LATENT_DIM), lambda i: (i, 0)),      # x
                pl.BlockSpec((1, H1), lambda i: (0, 0)),               # w1 (resident)
                pl.BlockSpec((1, H1), lambda i: (0, 0)),               # b1 (resident)
                pl.BlockSpec((H1, H2), lambda i: (0, 0)),              # w2 (bf16, resident)
                pl.BlockSpec((1, H2), lambda i: (0, 0)),               # b2 (resident)
                pl.BlockSpec((1, H2), lambda i: (0, 0)),               # w3 row (resident)
                pl.BlockSpec(memory_space=pltpu.MemorySpace.SMEM),     # b3 scalar
            ],
            out_specs=pl.BlockSpec((tb, OUT), lambda i: (i, 0)),
        ),
        compiler_params=pltpu.CompilerParams(
            dimension_semantics=("parallel",)),
    )(x, w1, b1, w2, b2, w3_row, b3)
    return out[:B]


def init_params(key):
    """PyTorch nn.Linear default init: uniform(-1/sqrt(fan_in), 1/sqrt(fan_in)).
    Weights stored (in_features, out_features) so forward is x @ W + b."""
    ks = jax.random.split(key, 6)

    def lin(kw, kb, fan_in, fan_out):
        bound = 1.0 / jnp.sqrt(jnp.float32(fan_in))
        w = jax.random.uniform(kw, (fan_in, fan_out), jnp.float32, -bound, bound)
        b = jax.random.uniform(kb, (1, fan_out), jnp.float32, -bound, bound)
        return w, b

    w1, b1 = lin(ks[0], ks[1], LATENT_DIM, H1)
    w2, b2 = lin(ks[2], ks[3], H1, H2)
    w3, b3 = lin(ks[4], ks[5], H2, OUT)
    return (w1, b1, w2, b2, w3, b3)


def prepare_params(params):
    """One-time param prep so the per-call kernel streams w2 in bf16 and uses
    w3 as a row vector (amortizes the conversion across all forward calls)."""
    w1, b1, w2, b2, w3, b3 = params
    return (w1, b1, w2.astype(jnp.bfloat16), b2, w3.reshape(1, H2), b3)


def reference_forward(x, prepped):
    """Pure-JAX reference with the same bf16 layer-2 weight path."""
    w1, b1, w2_bf16, b2, w3_row, b3 = prepped
    h1 = _leaky_relu(x @ w1 + b1)
    h2 = jnp.dot(h1.astype(jnp.bfloat16), w2_bf16,
                 preferred_element_type=jnp.float32) + b2
    h2 = _leaky_relu(h2)
    z = jnp.sum(h2 * w3_row, axis=-1, keepdims=True) + b3
    return 1.0 / (1.0 + jnp.exp(-z))


def reference_forward_f32(x, params):
    """Full-precision reference matching the original PyTorch module."""
    w1, b1, w2, b2, w3, b3 = params
    h1 = _leaky_relu(x @ w1 + b1)
    h2 = _leaky_relu(h1 @ w2 + b2)
    return jax.nn.sigmoid(h2 @ w3 + b3)


if __name__ == "__main__":
    key = jax.random.PRNGKey(0)
    k_x, k_x2, k_p = jax.random.split(key, 3)

    raw_params = init_params(k_p)
    params = prepare_params(raw_params)

    # Case 1: small batch (single batch tile).
    batch = 8
    x = jax.random.normal(k_x, (batch, LATENT_DIM), jnp.float32)
    out = jax.block_until_ready(discriminator_forward(x, params))
    ref = reference_forward(x, params)
    ref_f32 = reference_forward_f32(x, raw_params)
    assert out.shape == (batch, OUT)
    assert jnp.allclose(out, ref, atol=2e-4, rtol=1e-4), \
        float(jnp.max(jnp.abs(out - ref)))
    assert jnp.allclose(out, ref_f32, atol=5e-2), \
        float(jnp.max(jnp.abs(out - ref_f32)))   # bf16-w2 vs f32 module semantics

    # Case 2: batch needing padding + multiple (parallel) batch tiles.
    batch2 = 200
    x2 = jax.random.normal(k_x2, (batch2, LATENT_DIM), jnp.float32)
    out2 = jax.block_until_ready(discriminator_forward(x2, params))
    ref2 = reference_forward(x2, params)
    assert out2.shape == (batch2, OUT)
    assert jnp.allclose(out2, ref2, atol=2e-4, rtol=1e-4), \
        float(jnp.max(jnp.abs(out2 - ref2)))

    print("KERNEL_OK")
</pallas_src>

<mosaic_0001>
module attributes {stable_mosaic.version = 11 : i64} {
  func.func @discriminator_kernel(%arg0: i32, %arg1: memref<8x1xf32, #tpu.memory_space<vmem>>, %arg2: memref<1x512xf32, #tpu.memory_space<vmem>>, %arg3: memref<1x512xf32, #tpu.memory_space<vmem>>, %arg4: memref<512x1024xbf16, #tpu.memory_space<vmem>>, %arg5: memref<1x1024xf32, #tpu.memory_space<vmem>>, %arg6: memref<1x1024xf32, #tpu.memory_space<vmem>>, %arg7: memref<1x1xf32, #tpu.memory_space<smem>>, %arg8: memref<8x1xf32, #tpu.memory_space<vmem>>) attributes {dimension_semantics = [#tpu.dimension_semantics<parallel>], iteration_bounds = array<i64: 1>, scalar_prefetch = 0 : i64, scratch_operands = 0 : i64, tpu.core_type = #tpu.core_type<tc>, window_params = [{transform_indices = @transform_0, window_bounds = array<i64: 8, 1>}, {pipeline_mode = #tpu.pipeline_mode<synchronous>, transform_indices = @transform_1, window_bounds = array<i64: 1, 512>}, {pipeline_mode = #tpu.pipeline_mode<synchronous>, transform_indices = @transform_2, window_bounds = array<i64: 1, 512>}, {pipeline_mode = #tpu.pipeline_mode<synchronous>, transform_indices = @transform_3, window_bounds = array<i64: 512, 1024>}, {pipeline_mode = #tpu.pipeline_mode<synchronous>, transform_indices = @transform_4, window_bounds = array<i64: 1, 1024>}, {pipeline_mode = #tpu.pipeline_mode<synchronous>, transform_indices = @transform_5, window_bounds = array<i64: 1, 1024>}, {transform_indices = @transform_6, window_bounds = array<i64: 1, 1>}, {transform_indices = @transform_7, window_bounds = array<i64: 8, 1>}]} {
    %c0 = arith.constant 0 : index
    %c0_0 = arith.constant 0 : index
    %0 = vector.load %arg3[%c0, %c0_0] : memref<1x512xf32, #tpu.memory_space<vmem>>, vector<1x512xf32>
    %c0_1 = arith.constant 0 : index
    %c0_2 = arith.constant 0 : index
    %1 = vector.load %arg1[%c0_1, %c0_2] : memref<8x1xf32, #tpu.memory_space<vmem>>, vector<8x1xf32>
    %c0_3 = arith.constant 0 : index
    %c0_4 = arith.constant 0 : index
    %2 = vector.load %arg2[%c0_3, %c0_4] : memref<1x512xf32, #tpu.memory_space<vmem>>, vector<1x512xf32>
    %3 = vector.broadcast %1 : vector<8x1xf32> to vector<8x512xf32>
    %4 = vector.broadcast %2 : vector<1x512xf32> to vector<8x512xf32>
    %5 = arith.mulf %3, %4 : vector<8x512xf32>
    %6 = vector.broadcast %0 : vector<1x512xf32> to vector<8x512xf32>
    %7 = arith.addf %6, %5 : vector<8x512xf32>
    %cst = arith.constant 0.000000e+00 : f32
    %8 = vector.broadcast %cst : f32 to vector<8x512xf32>
    %9 = arith.cmpf oge, %7, %8 : vector<8x512xf32>
    %cst_5 = arith.constant 0.00999999977 : f32
    %10 = vector.broadcast %cst_5 : f32 to vector<8x512xf32>
    %11 = arith.mulf %10, %7 : vector<8x512xf32>
    %12 = arith.select %9, %7, %11 : vector<8x512xi1>, vector<8x512xf32>
    %13 = arith.truncf %12 : vector<8x512xf32> to vector<8x512xbf16>
    %c0_6 = arith.constant 0 : index
    %c0_7 = arith.constant 0 : index
    %14 = vector.load %arg4[%c0_6, %c0_7] : memref<512x1024xbf16, #tpu.memory_space<vmem>>, vector<512x1024xbf16>
    %cst_8 = arith.constant dense<0.000000e+00> : vector<8x1024xf32>
    %15 = tpu.matmul %13, %14, %cst_8 {dimension_numbers = #tpu.dot_dimension_numbers<[1], [0], [0], [1], [0, 0, 1, 1], [], []>} : vector<8x512xbf16>, vector<512x1024xbf16>, vector<8x1024xf32> -> vector<8x1024xf32>
    %c0_9 = arith.constant 0 : index
    %c0_10 = arith.constant 0 : index
    %16 = vector.load %arg5[%c0_9, %c0_10] : memref<1x1024xf32, #tpu.memory_space<vmem>>, vector<1x1024xf32>
    %17 = vector.broadcast %16 : vector<1x1024xf32> to vector<8x1024xf32>
    %18 = arith.addf %15, %17 : vector<8x1024xf32>
    %cst_11 = arith.constant 0.000000e+00 : f32
    %19 = vector.broadcast %cst_11 : f32 to vector<8x1024xf32>
    %20 = arith.cmpf oge, %18, %19 : vector<8x1024xf32>
    %cst_12 = arith.constant 0.00999999977 : f32
    %21 = vector.broadcast %cst_12 : f32 to vector<8x1024xf32>
    %22 = arith.mulf %21, %18 : vector<8x1024xf32>
    %23 = arith.select %20, %18, %22 : vector<8x1024xi1>, vector<8x1024xf32>
    %c0_13 = arith.constant 0 : index
    %c0_14 = arith.constant 0 : index
    %24 = vector.load %arg6[%c0_13, %c0_14] : memref<1x1024xf32, #tpu.memory_space<vmem>>, vector<1x1024xf32>
    %25 = vector.broadcast %24 : vector<1x1024xf32> to vector<8x1024xf32>
    %26 = arith.mulf %23, %25 : vector<8x1024xf32>
    %cst_15 = arith.constant dense<0.000000e+00> : vector<8xf32>
    %27 = vector.multi_reduction <add>, %26, %cst_15 [1] : vector<8x1024xf32> to vector<8xf32>
    %28 = vector.shape_cast %27 : vector<8xf32> to vector<8x1xf32>
    %c0_16 = arith.constant 0 : index
    %c0_17 = arith.constant 0 : index
    %29 = memref.load %arg7[%c0_16, %c0_17] : memref<1x1xf32, #tpu.memory_space<smem>>
    %30 = vector.broadcast %29 : f32 to vector<8x1xf32>
    %31 = arith.addf %28, %30 : vector<8x1xf32>
    %cst_18 = arith.constant 0.000000e+00 : f32
    %32 = vector.broadcast %cst_18 : f32 to vector<8x1xf32>
    %33 = arith.subf %32, %31 : vector<8x1xf32>
    %34 = math.exp %33 : vector<8x1xf32>
    %cst_19 = arith.constant 1.000000e+00 : f32
    %35 = vector.broadcast %cst_19 : f32 to vector<8x1xf32>
    %36 = arith.addf %35, %34 : vector<8x1xf32>
    %cst_20 = arith.constant 1.000000e+00 : f32
    %37 = vector.broadcast %cst_20 : f32 to vector<8x1xf32>
    %38 = arith.divf %37, %36 : vector<8x1xf32>
    %c0_21 = arith.constant 0 : index
    %c0_22 = arith.constant 0 : index
    %39 = vector.load %arg8[%c0_21, %c0_22] : memref<8x1xf32, #tpu.memory_space<vmem>>, vector<8x1xf32>
    tpu.vector_store %arg8[%c0_21, %c0_22], %38 {strides = array<i32>} : memref<8x1xf32, #tpu.memory_space<vmem>>, vector<8x1xf32>,
    return
  }
  func.func @transform_0(%arg0: i32) -> (i32, i32) {
    %c0_i32 = arith.constant 0 : i32
    %c0_i32_0 = arith.constant 0 : i32
    return %arg0, %c0_i32 : i32, i32
  }
  func.func @transform_1(%arg0: i32) -> (i32, i32) {
    %c0_i32 = arith.constant 0 : i32
    %c0_i32_0 = arith.constant 0 : i32
    %c0_i32_1 = arith.constant 0 : i32
    return %c0_i32, %c0_i32_0 : i32, i32
  }
  func.func @transform_2(%arg0: i32) -> (i32, i32) {
    %c0_i32 = arith.constant 0 : i32
    %c0_i32_0 = arith.constant 0 : i32
    %c0_i32_1 = arith.constant 0 : i32
    return %c0_i32, %c0_i32_0 : i32, i32
  }
  func.func @transform_3(%arg0: i32) -> (i32, i32) {
    %c0_i32 = arith.constant 0 : i32
    %c0_i32_0 = arith.constant 0 : i32
    %c0_i32_1 = arith.constant 0 : i32
    return %c0_i32, %c0_i32_0 : i32, i32
  }
  func.func @transform_4(%arg0: i32) -> (i32, i32) {
    %c0_i32 = arith.constant 0 : i32
    %c0_i32_0 = arith.constant 0 : i32
    %c0_i32_1 = arith.constant 0 : i32
    return %c0_i32, %c0_i32_0 : i32, i32
  }
  func.func @transform_5(%arg0: i32) -> (i32, i32) {
    %c0_i32 = arith.constant 0 : i32
    %c0_i32_0 = arith.constant 0 : i32
    %c0_i32_1 = arith.constant 0 : i32
    return %c0_i32, %c0_i32_0 : i32, i32
  }
  func.func @transform_6(%arg0: i32) -> (i32, i32) {
    %c0_i32 = arith.constant 0 : i32
    %c0_i32_0 = arith.constant 0 : i32
    %c0_i32_1 = arith.constant 0 : i32
    return %c0_i32, %c0_i32_0 : i32, i32
  }
  func.func @transform_7(%arg0: i32) -> (i32, i32) {
    %c0_i32 = arith.constant 0 : i32
    %c0_i32_0 = arith.constant 0 : i32
    return %arg0, %c0_i32 : i32, i32
  }
}

</mosaic_0001>

<llo_original>
// kernel: tpu_custom_call.1
$region0: #{tpu_custom_call.1}
  #allocation0 [shape = 'u32[]', space=smem, size = 0x4, offset = 0x4, fixed_abs, tag = 'smem constant byte address 0x4 - core index']
  #allocation1 [shape = 'u32[144,128]{1,0:T(1,128)}', space=vmem, size = 0x12000, scoped, tag = 'internal scratch']
  #allocation2 [shape = 'f32[1,1]{1,0:T(1,128)S(6)}', space=smem, size = 0x200, scoped, tag = 'scoped memory for tpu_custom_call.1']
  %s0 = inlined_call_operand.vmem [shape: f32[8,1], index: 0, kind: input, shape index: {}]
  %s1 = inlined_call_operand.hbm [shape: f32[1,512], index: 1, kind: input, shape index: {}]
  %s2 = inlined_call_operand.vmem [shape: f32[1,512], index: 2, kind: input, shape index: {}]
  %s3 = inlined_call_operand.hbm [shape: bf16[512,1024], index: 3, kind: input, shape index: {}]
  %s4 = inlined_call_operand.vmem [shape: f32[1,1024], index: 4, kind: input, shape index: {}]
  %s5 = inlined_call_operand.vmem [shape: f32[1,1024], index: 5, kind: input, shape index: {}]
  %s6 = inlined_call_operand.<no memory space> [shape: f32[1,1], index: 6, kind: input, shape index: {}]
  %s7 = inlined_call_operand.vmem [shape: f32[8,1], index: 7, kind: output, shape index: {}]
  %s8 = sld [smem:[#allocation0]]
  $region46: #{tpu_custom_call.1} parent=0
    _
  %s10 = ssub.s32 1, %s8
  %s11 = scalar_select 0, %s10, %s8
  %12 = sst [smem:[#allocation2]] %s6
  $region1: #{tpu_custom_call.1} parent=0
    #allocation3 [shape = 'u8[2048]{0}', space=vmem, size = 0x800, scoped, tag = 'input window, operand 1, single buffered']
    #allocation4 [shape = 's32[1]{0}', space=sflag, size = 0x4, scoped, tag = 'scoped memory for tpu_custom_call.1']
    #allocation5 [shape = 'u8[1048576]{0}', space=vmem, size = 0x100000, scoped, tag = 'input window, operand 3, single buffered']
    #allocation6 [shape = 's32[1]{0}', space=sflag, size = 0x4, scoped, tag = 'scoped memory for tpu_custom_call.1']
    %13 = vsyncpa [#allocation4], 0
    %14 = vsyncpa [#allocation6], 0
    // Predicated region
    $region2: #{tpu_custom_call.1} parent=1 // pred_check
      _
    $region3: #{tpu_custom_call.1} parent=1 // pred_check_branch
      %16 = sbr.rel (0) target = $region5
    $region4: #{tpu_custom_call.1} parent=1 // pred_region
      _
    $region5: #{tpu_custom_call.1} parent=1 // pred_fallthru
      _
    // Predicated region
    $region6: #{tpu_custom_call.1} parent=1 // pred_check
      _
    $region7: #{tpu_custom_call.1} parent=1 // pred_check_branch
      %18 = sbr.rel (0) target = $region9
    $region8: #{tpu_custom_call.1} parent=1 // pred_region
      %s20 = ssub.s32 64, 64
      %21 = vsyncadd [#allocation4], %s20
      %s23 = sshll.u32 [#allocation3], 4
      %s24 = int_to_ptr.vmem [resolvable:$true] %s23
      %26 = dma.hbm_to_vmem [thread:$0]  %s1, 64, %s24, [#allocation4]
    $region9: #{tpu_custom_call.1} parent=1 // pred_fallthru
      _
    // Predicated region
    $region10: #{tpu_custom_call.1} parent=1 // pred_check
      _
    $region11: #{tpu_custom_call.1} parent=1 // pred_check_branch
      %28 = sbr.rel (0) target = $region13
    $region12: #{tpu_custom_call.1} parent=1 // pred_region
      _
    $region13: #{tpu_custom_call.1} parent=1 // pred_fallthru
      _
    // Predicated region
    $region14: #{tpu_custom_call.1} parent=1 // pred_check
      _
    $region15: #{tpu_custom_call.1} parent=1 // pred_check_branch
      %30 = sbr.rel (0) target = $region17
    $region16: #{tpu_custom_call.1} parent=1 // pred_region
      %s32 = ssub.s32 32768, 32768
      %33 = vsyncadd [#allocation6], %s32
      %s34 = sshll.u32 [#allocation5], 4
      %s35 = int_to_ptr.vmem [resolvable:$true] %s34
      %40 = dma.hbm_to_vmem [thread:$0]  %s3, 32768, %s35, [#allocation6], 512, 512, 32
    $region17: #{tpu_custom_call.1} parent=1 // pred_fallthru
      _
    // Predicated region
    $region18: #{tpu_custom_call.1} parent=1 // pred_check
      _
    $region19: #{tpu_custom_call.1} parent=1 // pred_check_branch
      %42 = sbr.rel (0) target = $region21
    $region20: #{tpu_custom_call.1} parent=1 // pred_region
      _
    $region21: #{tpu_custom_call.1} parent=1 // pred_fallthru
      _
    // Predicated region
    $region22: #{tpu_custom_call.1} parent=1 // pred_check
      _
    $region23: #{tpu_custom_call.1} parent=1 // pred_check_branch
      %44 = sbr.rel (0) target = $region25
    $region24: #{tpu_custom_call.1} parent=1 // pred_region
      _
    $region25: #{tpu_custom_call.1} parent=1 // pred_fallthru
      _
    // Predicated region
    $region26: #{tpu_custom_call.1} parent=1 // pred_check
      _
    $region27: #{tpu_custom_call.1} parent=1 // pred_check_branch
      %46 = sbr.rel (0) target = $region29
    $region28: #{tpu_custom_call.1} parent=1 // pred_region
      _
    $region29: #{tpu_custom_call.1} parent=1 // pred_fallthru
      _
    // Predicated region
    $region30: #{tpu_custom_call.1} parent=1 // pred_check
      _
    $region31: #{tpu_custom_call.1} parent=1 // pred_check_branch
      %48 = sbr.rel (0) target = $region33
    $region32: #{tpu_custom_call.1} parent=1 // pred_region
      %49 = dma.done [#allocation4], 64
    $region33: #{tpu_custom_call.1} parent=1 // pred_fallthru
      _
    // Predicated region
    $region34: #{tpu_custom_call.1} parent=1 // pred_check
      _
    $region35: #{tpu_custom_call.1} parent=1 // pred_check_branch
      %51 = sbr.rel (0) target = $region37
    $region36: #{tpu_custom_call.1} parent=1 // pred_region
      %52 = dma.done [#allocation6], 32768
    $region37: #{tpu_custom_call.1} parent=1 // pred_fallthru
      _
    %v53 = vld [vmem:[%s2] sm:$0xf]
    %v54 = vld [vmem:[%s0] sm:$0xff]
    %v55 = vld [vmem:[#allocation3] sm:$0xf]
    %57 = vset.pattern.permute.xlu0 0
    %58 = vperm.xlu0 %57, %v54
    %v59 = vpop.permute.xlu0 %58
    %v62 = vlaneseq
    %v63 = vshrl.u32 %v62, 7
    %v64 = vsub.s32 0, %v63
    %v65 = vrot.slane %v55, %v64
    %v66 = vlaneseq
    %v67 = vshrl.u32 %v66, 7
    %v68 = vsub.s32 1, %v67
    %v69 = vrot.slane %v55, %v68
    %v70 = vlaneseq
    %v71 = vshrl.u32 %v70, 7
    %v72 = vsub.s32 2, %v71
    %v73 = vrot.slane %v55, %v72
    %v74 = vlaneseq
    %v75 = vshrl.u32 %v74, 7
    %v76 = vsub.s32 3, %v75
    %v77 = vrot.slane %v55, %v76
    %v82 = vmul.f32 %v59, %v65
    %v83 = vmul.f32 %v59, %v69
    %v84 = vmul.f32 %v59, %v73
    %v85 = vmul.f32 %v59, %v77
    %v87 = vlaneseq
    %v88 = vshrl.u32 %v87, 7
    %v89 = vsub.s32 0, %v88
    %v90 = vrot.slane %v53, %v89
    %v91 = vlaneseq
    %v92 = vshrl.u32 %v91, 7
    %v93 = vsub.s32 1, %v92
    %v94 = vrot.slane %v53, %v93
    %v95 = vlaneseq
    %v96 = vshrl.u32 %v95, 7
    %v97 = vsub.s32 2, %v96
    %v98 = vrot.slane %v53, %v97
    %v99 = vlaneseq
    %v100 = vshrl.u32 %v99, 7
    %v101 = vsub.s32 3, %v100
    %v102 = vrot.slane %v53, %v101
    %v107 = vadd.f32 %v90, %v82
    %v108 = vadd.f32 %v94, %v83
    %v109 = vadd.f32 %v98, %v84
    %v110 = vadd.f32 %v102, %v85
    %vm111 = vcmp.ge.f32.partialorder %v107, 0.0
    %vm112 = vcmp.ge.f32.partialorder %v108, 0.0
    %vm113 = vcmp.ge.f32.partialorder %v109, 0.0
    %vm114 = vcmp.ge.f32.partialorder %v110, 0.0
    %v115 = vmul.f32 %v107, 0.01
    %v116 = vmul.f32 %v108, 0.01
    %v117 = vmul.f32 %v109, 0.01
    %v118 = vmul.f32 %v110, 0.01
    %v119 = vsel %vm111, %v107, %v115
    %v120 = vsel %vm112, %v108, %v116
    %v121 = vsel %vm113, %v109, %v117
    %v122 = vsel %vm114, %v110, %v118
    %v123 = vpack.c.bf16 %v119, %v119
    %v124 = vpack.c.bf16 %v120, %v120
    %v125 = vpack.c.bf16 %v121, %v121
    %v126 = vpack.c.bf16 %v122, %v122
    %v127 = vld [vmem:[#allocation5] sm:$0xff]
    %v128 = vld [vmem:[#allocation5 + $0x8] sm:$0xff]
    %v129 = vld [vmem:[#allocation5 + $0x10] sm:$0xff]
    %v130 = vld [vmem:[#allocation5 + $0x18] sm:$0xff]
    %v131 = vld [vmem:[#allocation5 + $0x20] sm:$0xff]
    %v132 = vld [vmem:[#allocation5 + $0x28] sm:$0xff]
    %v133 = vld [vmem:[#allocation5 + $0x30] sm:$0xff]
    %v134 = vld [vmem:[#allocation5 + $0x38] sm:$0xff]
    %v135 = vld [vmem:[#allocation5 + $0x40] sm:$0xff]
    %v136 = vld [vmem:[#allocation5 + $0x48] sm:$0xff]
    %v137 = vld [vmem:[#allocation5 + $0x50] sm:$0xff]
    %v138 = vld [vmem:[#allocation5 + $0x58] sm:$0xff]
    %v139 = vld [vmem:[#allocation5 + $0x60] sm:$0xff]
    %v140 = vld [vmem:[#allocation5 + $0x68] sm:$0xff]
    %v141 = vld [vmem:[#allocation5 + $0x70] sm:$0xff]
    %v142 = vld [vmem:[#allocation5 + $0x78] sm:$0xff]
    %v143 = vld [vmem:[#allocation5 + $0x80] sm:$0xff]
    %v144 = vld [vmem:[#allocation5 + $0x88] sm:$0xff]
    %v145 = vld [vmem:[#allocation5 + $0x90] sm:$0xff]
    %v146 = vld [vmem:[#allocation5 + $0x98] sm:$0xff]
    %v147 = vld [vmem:[#allocation5 + $0xa0] sm:$0xff]
    %v148 = vld [vmem:[#allocation5 + $0xa8] sm:$0xff]
    %v149 = vld [vmem:[#allocation5 + $0xb0] sm:$0xff]
    %v150 = vld [vmem:[#allocation5 + $0xb8] sm:$0xff]
    %v151 = vld [vmem:[#allocation5 + $0xc0] sm:$0xff]
    %v152 = vld [vmem:[#allocation5 + $0xc8] sm:$0xff]
    %v153 = vld [vmem:[#allocation5 + $0xd0] sm:$0xff]
    %v154 = vld [vmem:[#allocation5 + $0xd8] sm:$0xff]
    %v155 = vld [vmem:[#allocation5 + $0xe0] sm:$0xff]
    %v156 = vld [vmem:[#allocation5 + $0xe8] sm:$0xff]
    %v157 = vld [vmem:[#allocation5 + $0xf0] sm:$0xff]
    %v158 = vld [vmem:[#allocation5 + $0xf8] sm:$0xff]
    %v159 = vld [vmem:[#allocation5 + $0x100] sm:$0xff]
    %v160 = vld [vmem:[#allocation5 + $0x108] sm:$0xff]
    %v161 = vld [vmem:[#allocation5 + $0x110] sm:$0xff]
    %v162 = vld [vmem:[#allocation5 + $0x118] sm:$0xff]
    %v163 = vld [vmem:[#allocation5 + $0x120] sm:$0xff]
    %v164 = vld [vmem:[#allocation5 + $0x128] sm:$0xff]
    %v165 = vld [vmem:[#allocation5 + $0x130] sm:$0xff]
    %v166 = vld [vmem:[#allocation5 + $0x138] sm:$0xff]
    %v167 = vld [vmem:[#allocation5 + $0x140] sm:$0xff]
    %v168 = vld [vmem:[#allocation5 + $0x148] sm:$0xff]
    %v169 = vld [vmem:[#allocation5 + $0x150] sm:$0xff]
    %v170 = vld [vmem:[#allocation5 + $0x158] sm:$0xff]
    %v171 = vld [vmem:[#allocation5 + $0x160] sm:$0xff]
    %v172 = vld [vmem:[#allocation5 + $0x168] sm:$0xff]
    %v173 = vld [vmem:[#allocation5 + $0x170] sm:$0xff]
    %v174 = vld [vmem:[#allocation5 + $0x178] sm:$0xff]
    %v175 = vld [vmem:[#allocation5 + $0x180] sm:$0xff]
    %v176 = vld [vmem:[#allocation5 + $0x188] sm:$0xff]
    %v177 = vld [vmem:[#allocation5 + $0x190] sm:$0xff]
    %v178 = vld [vmem:[#allocation5 + $0x198] sm:$0xff]
    %v179 = vld [vmem:[#allocation5 + $0x1a0] sm:$0xff]
    %v180 = vld [vmem:[#allocation5 + $0x1a8] sm:$0xff]
    %v181 = vld [vmem:[#allocation5 + $0x1b0] sm:$0xff]
    %v182 = vld [vmem:[#allocation5 + $0x1b8] sm:$0xff]
    %v183 = vld [vmem:[#allocation5 + $0x1c0] sm:$0xff]
    %v184 = vld [vmem:[#allocation5 + $0x1c8] sm:$0xff]
    %v185 = vld [vmem:[#allocation5 + $0x1d0] sm:$0xff]
    %v186 = vld [vmem:[#allocation5 + $0x1d8] sm:$0xff]
    %v187 = vld [vmem:[#allocation5 + $0x1e0] sm:$0xff]
    %v188 = vld [vmem:[#allocation5 + $0x1e8] sm:$0xff]
    %v189 = vld [vmem:[#allocation5 + $0x1f0] sm:$0xff]
    %v190 = vld [vmem:[#allocation5 + $0x1f8] sm:$0xff]
    %v191 = vld [vmem:[#allocation5 + $0x200] sm:$0xff]
    %v192 = vld [vmem:[#allocation5 + $0x208] sm:$0xff]
    %v193 = vld [vmem:[#allocation5 + $0x210] sm:$0xff]
    %v194 = vld [vmem:[#allocation5 + $0x218] sm:$0xff]
    %v195 = vld [vmem:[#allocation5 + $0x220] sm:$0xff]
    %v196 = vld [vmem:[#allocation5 + $0x228] sm:$0xff]
    %v197 = vld [vmem:[#allocation5 + $0x230] sm:$0xff]
    %v198 = vld [vmem:[#allocation5 + $0x238] sm:$0xff]
    %v199 = vld [vmem:[#allocation5 + $0x240] sm:$0xff]
    %v200 = vld [vmem:[#allocation5 + $0x248] sm:$0xff]
    %v201 = vld [vmem:[#allocation5 + $0x250] sm:$0xff]
    %v202 = vld [vmem:[#allocation5 + $0x258] sm:$0xff]
    %v203 = vld [vmem:[#allocation5 + $0x260] sm:$0xff]
    %v204 = vld [vmem:[#allocation5 + $0x268] sm:$0xff]
    %v205 = vld [vmem:[#allocation5 + $0x270] sm:$0xff]
    %v206 = vld [vmem:[#allocation5 + $0x278] sm:$0xff]
    %v207 = vld [vmem:[#allocation5 + $0x280] sm:$0xff]
    %v208 = vld [vmem:[#allocation5 + $0x288] sm:$0xff]
    %v209 = vld [vmem:[#allocation5 + $0x290] sm:$0xff]
    %v210 = vld [vmem:[#allocation5 + $0x298] sm:$0xff]
    %v211 = vld [vmem:[#allocation5 + $0x2a0] sm:$0xff]
    %v212 = vld [vmem:[#allocation5 + $0x2a8] sm:$0xff]
    %v213 = vld [vmem:[#allocation5 + $0x2b0] sm:$0xff]
    %v214 = vld [vmem:[#allocation5 + $0x2b8] sm:$0xff]
    %v215 = vld [vmem:[#allocation5 + $0x2c0] sm:$0xff]
    %v216 = vld [vmem:[#allocation5 + $0x2c8] sm:$0xff]
    %v217 = vld [vmem:[#allocation5 + $0x2d0] sm:$0xff]
    %v218 = vld [vmem:[#allocation5 + $0x2d8] sm:$0xff]
    %v219 = vld [vmem:[#allocation5 + $0x2e0] sm:$0xff]
    %v220 = vld [vmem:[#allocation5 + $0x2e8] sm:$0xff]
    %v221 = vld [vmem:[#allocation5 + $0x2f0] sm:$0xff]
    %v222 = vld [vmem:[#allocation5 + $0x2f8] sm:$0xff]
    %v223 = vld [vmem:[#allocation5 + $0x300] sm:$0xff]
    %v224 = vld [vmem:[#allocation5 + $0x308] sm:$0xff]
    %v225 = vld [vmem:[#allocation5 + $0x310] sm:$0xff]
    %v226 = vld [vmem:[#allocation5 + $0x318] sm:$0xff]
    %v227 = vld [vmem:[#allocation5 + $0x320] sm:$0xff]
    %v228 = vld [vmem:[#allocation5 + $0x328] sm:$0xff]
    %v229 = vld [vmem:[#allocation5 + $0x330] sm:$0xff]
    %v230 = vld [vmem:[#allocation5 + $0x338] sm:$0xff]
    %v231 = vld [vmem:[#allocation5 + $0x340] sm:$0xff]
    %v232 = vld [vmem:[#allocation5 + $0x348] sm:$0xff]
    %v233 = vld [vmem:[#allocation5 + $0x350] sm:$0xff]
    %v234 = vld [vmem:[#allocation5 + $0x358] sm:$0xff]
    %v235 = vld [vmem:[#allocation5 + $0x360] sm:$0xff]
    %v236 = vld [vmem:[#allocation5 + $0x368] sm:$0xff]
    %v237 = vld [vmem:[#allocation5 + $0x370] sm:$0xff]
    %v238 = vld [vmem:[#allocation5 + $0x378] sm:$0xff]
    %v239 = vld [vmem:[#allocation5 + $0x380] sm:$0xff]
    %v240 = vld [vmem:[#allocation5 + $0x388] sm:$0xff]
    %v241 = vld [vmem:[#allocation5 + $0x390] sm:$0xff]
    %v242 = vld [vmem:[#allocation5 + $0x398] sm:$0xff]
    %v243 = vld [vmem:[#allocation5 + $0x3a0] sm:$0xff]
    %v244 = vld [vmem:[#allocation5 + $0x3a8] sm:$0xff]
    %v245 = vld [vmem:[#allocation5 + $0x3b0] sm:$0xff]
    %v246 = vld [vmem:[#allocation5 + $0x3b8] sm:$0xff]
    %v247 = vld [vmem:[#allocation5 + $0x3c0] sm:$0xff]
    %v248 = vld [vmem:[#allocation5 + $0x3c8] sm:$0xff]
    %v249 = vld [vmem:[#allocation5 + $0x3d0] sm:$0xff]
    %v250 = vld [vmem:[#allocation5 + $0x3d8] sm:$0xff]
    %v251 = vld [vmem:[#allocation5 + $0x3e0] sm:$0xff]
    %v252 = vld [vmem:[#allocation5 + $0x3e8] sm:$0xff]
    %v253 = vld [vmem:[#allocation5 + $0x3f0] sm:$0xff]
    %v254 = vld [vmem:[#allocation5 + $0x3f8] sm:$0xff]
    %v255 = vld [vmem:[#allocation5 + $0x400] sm:$0xff]
    %v256 = vld [vmem:[#allocation5 + $0x408] sm:$0xff]
    %v257 = vld [vmem:[#allocation5 + $0x410] sm:$0xff]
    %v258 = vld [vmem:[#allocation5 + $0x418] sm:$0xff]
    %v259 = vld [vmem:[#allocation5 + $0x420] sm:$0xff]
    %v260 = vld [vmem:[#allocation5 + $0x428] sm:$0xff]
    %v261 = vld [vmem:[#allocation5 + $0x430] sm:$0xff]
    %v262 = vld [vmem:[#allocation5 + $0x438] sm:$0xff]
    %v263 = vld [vmem:[#allocation5 + $0x440] sm:$0xff]
    %v264 = vld [vmem:[#allocation5 + $0x448] sm:$0xff]
    %v265 = vld [vmem:[#allocation5 + $0x450] sm:$0xff]
    %v266 = vld [vmem:[#allocation5 + $0x458] sm:$0xff]
    %v267 = vld [vmem:[#allocation5 + $0x460] sm:$0xff]
    %v268 = vld [vmem:[#allocation5 + $0x468] sm:$0xff]
    %v269 = vld [vmem:[#allocation5 + $0x470] sm:$0xff]
    %v270 = vld [vmem:[#allocation5 + $0x478] sm:$0xff]
    %v271 = vld [vmem:[#allocation5 + $0x480] sm:$0xff]
    %v272 = vld [vmem:[#allocation5 + $0x488] sm:$0xff]
    %v273 = vld [vmem:[#allocation5 + $0x490] sm:$0xff]
    %v274 = vld [vmem:[#allocation5 + $0x498] sm:$0xff]
    %v275 = vld [vmem:[#allocation5 + $0x4a0] sm:$0xff]
    %v276 = vld [vmem:[#allocation5 + $0x4a8] sm:$0xff]
    %v277 = vld [vmem:[#allocation5 + $0x4b0] sm:$0xff]
    %v278 = vld [vmem:[#allocation5 + $0x4b8] sm:$0xff]
    %v279 = vld [vmem:[#allocation5 + $0x4c0] sm:$0xff]
    %v280 = vld [vmem:[#allocation5 + $0x4c8] sm:$0xff]
    %v281 = vld [vmem:[#allocation5 + $0x4d0] sm:$0xff]
    %v282 = vld [vmem:[#allocation5 + $0x4d8] sm:$0xff]
    %v283 = vld [vmem:[#allocation5 + $0x4e0] sm:$0xff]
    %v284 = vld [vmem:[#allocation5 + $0x4e8] sm:$0xff]
    %v285 = vld [vmem:[#allocation5 + $0x4f0] sm:$0xff]
    %v286 = vld [vmem:[#allocation5 + $0x4f8] sm:$0xff]
    %v287 = vld [vmem:[#allocation5 + $0x500] sm:$0xff]
    %v288 = vld [vmem:[#allocation5 + $0x508] sm:$0xff]
    %v289 = vld [vmem:[#allocation5 + $0x510] sm:$0xff]
    %v290 = vld [vmem:[#allocation5 + $0x518] sm:$0xff]
    %v291 = vld [vmem:[#allocation5 + $0x520] sm:$0xff]
    %v292 = vld [vmem:[#allocation5 + $0x528] sm:$0xff]
    %v293 = vld [vmem:[#allocation5 + $0x530] sm:$0xff]
    %v294 = vld [vmem:[#allocation5 + $0x538] sm:$0xff]
    %v295 = vld [vmem:[#allocation5 + $0x540] sm:$0xff]
    %v296 = vld [vmem:[#allocation5 + $0x548] sm:$0xff]
    %v297 = vld [vmem:[#allocation5 + $0x550] sm:$0xff]
    %v298 = vld [vmem:[#allocation5 + $0x558] sm:$0xff]
    %v299 = vld [vmem:[#allocation5 + $0x560] sm:$0xff]
    %v300 = vld [vmem:[#allocation5 + $0x568] sm:$0xff]
    %v301 = vld [vmem:[#allocation5 + $0x570] sm:$0xff]
    %v302 = vld [vmem:[#allocation5 + $0x578] sm:$0xff]
    %v303 = vld [vmem:[#allocation5 + $0x580] sm:$0xff]
    %v304 = vld [vmem:[#allocation5 + $0x588] sm:$0xff]
    %v305 = vld [vmem:[#allocation5 + $0x590] sm:$0xff]
    %v306 = vld [vmem:[#allocation5 + $0x598] sm:$0xff]
    %v307 = vld [vmem:[#allocation5 + $0x5a0] sm:$0xff]
    %v308 = vld [vmem:[#allocation5 + $0x5a8] sm:$0xff]
    %v309 = vld [vmem:[#allocation5 + $0x5b0] sm:$0xff]
    %v310 = vld [vmem:[#allocation5 + $0x5b8] sm:$0xff]
    %v311 = vld [vmem:[#allocation5 + $0x5c0] sm:$0xff]
    %v312 = vld [vmem:[#allocation5 + $0x5c8] sm:$0xff]
    %v313 = vld [vmem:[#allocation5 + $0x5d0] sm:$0xff]
    %v314 = vld [vmem:[#allocation5 + $0x5d8] sm:$0xff]
    %v315 = vld [vmem:[#allocation5 + $0x5e0] sm:$0xff]
    %v316 = vld [vmem:[#allocation5 + $0x5e8] sm:$0xff]
    %v317 = vld [vmem:[#allocation5 + $0x5f0] sm:$0xff]
    %v318 = vld [vmem:[#allocation5 + $0x5f8] sm:$0xff]
    %v319 = vld [vmem:[#allocation5 + $0x600] sm:$0xff]
    %v320 = vld [vmem:[#allocation5 + $0x608] sm:$0xff]
    %v321 = vld [vmem:[#allocation5 + $0x610] sm:$0xff]
    %v322 = vld [vmem:[#allocation5 + $0x618] sm:$0xff]
    %v323 = vld [vmem:[#allocation5 + $0x620] sm:$0xff]
    %v324 = vld [vmem:[#allocation5 + $0x628] sm:$0xff]
    %v325 = vld [vmem:[#allocation5 + $0x630] sm:$0xff]
    %v326 = vld [vmem:[#allocation5 + $0x638] sm:$0xff]
    %v327 = vld [vmem:[#allocation5 + $0x640] sm:$0xff]
    %v328 = vld [vmem:[#allocation5 + $0x648] sm:$0xff]
    %v329 = vld [vmem:[#allocation5 + $0x650] sm:$0xff]
    %v330 = vld [vmem:[#allocation5 + $0x658] sm:$0xff]
    %v331 = vld [vmem:[#allocation5 + $0x660] sm:$0xff]
    %v332 = vld [vmem:[#allocation5 + $0x668] sm:$0xff]
    %v333 = vld [vmem:[#allocation5 + $0x670] sm:$0xff]
    %v334 = vld [vmem:[#allocation5 + $0x678] sm:$0xff]
    %v335 = vld [vmem:[#allocation5 + $0x680] sm:$0xff]
    %v336 = vld [vmem:[#allocation5 + $0x688] sm:$0xff]
    %v337 = vld [vmem:[#allocation5 + $0x690] sm:$0xff]
    %v338 = vld [vmem:[#allocation5 + $0x698] sm:$0xff]
    %v339 = vld [vmem:[#allocation5 + $0x6a0] sm:$0xff]
    %v340 = vld [vmem:[#allocation5 + $0x6a8] sm:$0xff]
    %v341 = vld [vmem:[#allocation5 + $0x6b0] sm:$0xff]
    %v342 = vld [vmem:[#allocation5 + $0x6b8] sm:$0xff]
    %v343 = vld [vmem:[#allocation5 + $0x6c0] sm:$0xff]
    %v344 = vld [vmem:[#allocation5 + $0x6c8] sm:$0xff]
    %v345 = vld [vmem:[#allocation5 + $0x6d0] sm:$0xff]
    %v346 = vld [vmem:[#allocation5 + $0x6d8] sm:$0xff]
    %v347 = vld [vmem:[#allocation5 + $0x6e0] sm:$0xff]
    %v348 = vld [vmem:[#allocation5 + $0x6e8] sm:$0xff]
    %v349 = vld [vmem:[#allocation5 + $0x6f0] sm:$0xff]
    %v350 = vld [vmem:[#allocation5 + $0x6f8] sm:$0xff]
    %v351 = vld [vmem:[#allocation5 + $0x700] sm:$0xff]
    %v352 = vld [vmem:[#allocation5 + $0x708] sm:$0xff]
    %v353 = vld [vmem:[#allocation5 + $0x710] sm:$0xff]
    %v354 = vld [vmem:[#allocation5 + $0x718] sm:$0xff]
    %v355 = vld [vmem:[#allocation5 + $0x720] sm:$0xff]
    %v356 = vld [vmem:[#allocation5 + $0x728] sm:$0xff]
    %v357 = vld [vmem:[#allocation5 + $0x730] sm:$0xff]
    %v358 = vld [vmem:[#allocation5 + $0x738] sm:$0xff]
    %v359 = vld [vmem:[#allocation5 + $0x740] sm:$0xff]
    %v360 = vld [vmem:[#allocation5 + $0x748] sm:$0xff]
    %v361 = vld [vmem:[#allocation5 + $0x750] sm:$0xff]
    %v362 = vld [vmem:[#allocation5 + $0x758] sm:$0xff]
    %v363 = vld [vmem:[#allocation5 + $0x760] sm:$0xff]
    %v364 = vld [vmem:[#allocation5 + $0x768] sm:$0xff]
    %v365 = vld [vmem:[#allocation5 + $0x770] sm:$0xff]
    %v366 = vld [vmem:[#allocation5 + $0x778] sm:$0xff]
    %v367 = vld [vmem:[#allocation5 + $0x780] sm:$0xff]
    %v368 = vld [vmem:[#allocation5 + $0x788] sm:$0xff]
    %v369 = vld [vmem:[#allocation5 + $0x790] sm:$0xff]
    %v370 = vld [vmem:[#allocation5 + $0x798] sm:$0xff]
    %v371 = vld [vmem:[#allocation5 + $0x7a0] sm:$0xff]
    %v372 = vld [vmem:[#allocation5 + $0x7a8] sm:$0xff]
    %v373 = vld [vmem:[#allocation5 + $0x7b0] sm:$0xff]
    %v374 = vld [vmem:[#allocation5 + $0x7b8] sm:$0xff]
    %v375 = vld [vmem:[#allocation5 + $0x7c0] sm:$0xff]
    %v376 = vld [vmem:[#allocation5 + $0x7c8] sm:$0xff]
    %v377 = vld [vmem:[#allocation5 + $0x7d0] sm:$0xff]
    %v378 = vld [vmem:[#allocation5 + $0x7d8] sm:$0xff]
    %v379 = vld [vmem:[#allocation5 + $0x7e0] sm:$0xff]
    %v380 = vld [vmem:[#allocation5 + $0x7e8] sm:$0xff]
    %v381 = vld [vmem:[#allocation5 + $0x7f0] sm:$0xff]
    %v382 = vld [vmem:[#allocation5 + $0x7f8] sm:$0xff]
    %v383 = vld [vmem:[%s4] sm:$0xff]
    %v385 = vlaneseq
    %v386 = vshrl.u32 %v385, 7
    %v387 = vsub.s32 0, %v386
    %v388 = vrot.slane %v383, %v387
    %v389 = vlaneseq
    %v390 = vshrl.u32 %v389, 7
    %v391 = vsub.s32 1, %v390
    %v392 = vrot.slane %v383, %v391
    %v393 = vlaneseq
    %v394 = vshrl.u32 %v393, 7
    %v395 = vsub.s32 2, %v394
    %v396 = vrot.slane %v383, %v395
    %v397 = vlaneseq
    %v398 = vshrl.u32 %v397, 7
    %v399 = vsub.s32 3, %v398
    %v400 = vrot.slane %v383, %v399
    %v401 = vlaneseq
    %v402 = vshrl.u32 %v401, 7
    %v403 = vsub.s32 4, %v402
    %v404 = vrot.slane %v383, %v403
    %v405 = vlaneseq
    %v406 = vshrl.u32 %v405, 7
    %v407 = vsub.s32 5, %v406
    %v408 = vrot.slane %v383, %v407
    %v409 = vlaneseq
    %v410 = vshrl.u32 %v409, 7
    %v411 = vsub.s32 6, %v410
    %v412 = vrot.slane %v383, %v411
    %v413 = vlaneseq
    %v414 = vshrl.u32 %v413, 7
    %v415 = vsub.s32 7, %v414
    %v416 = vrot.slane %v383, %v415
    %v681 = vunpack.c.l.b16 %v127
    %v682 = vunpack.c.h.b16 %v127
    %v683 = vunpack.c.l.b16 %v128
    %v684 = vunpack.c.h.b16 %v128
    %v685 = vunpack.c.l.b16 %v129
    %v686 = vunpack.c.h.b16 %v129
    %v687 = vunpack.c.l.b16 %v130
    %v688 = vunpack.c.h.b16 %v130
    %v689 = vunpack.c.l.b16 %v131
    %v690 = vunpack.c.h.b16 %v131
    %v691 = vunpack.c.l.b16 %v132
    %v692 = vunpack.c.h.b16 %v132
    %v693 = vunpack.c.l.b16 %v133
    %v694 = vunpack.c.h.b16 %v133
    %v695 = vunpack.c.l.b16 %v134
    %v696 = vunpack.c.h.b16 %v134
    %v697 = vunpack.c.l.b16 %v135
    %v698 = vunpack.c.h.b16 %v135
    %v699 = vunpack.c.l.b16 %v136
    %v700 = vunpack.c.h.b16 %v136
    %v701 = vunpack.c.l.b16 %v137
    %v702 = vunpack.c.h.b16 %v137
    %v703 = vunpack.c.l.b16 %v138
    %v704 = vunpack.c.h.b16 %v138
    %v705 = vunpack.c.l.b16 %v139
    %v706 = vunpack.c.h.b16 %v139
    %v707 = vunpack.c.l.b16 %v140
    %v708 = vunpack.c.h.b16 %v140
    %v709 = vunpack.c.l.b16 %v141
    %v710 = vunpack.c.h.b16 %v141
    %v711 = vunpack.c.l.b16 %v142
    %v712 = vunpack.c.h.b16 %v142
    %v713 = vunpack.c.l.b16 %v143
    %v714 = vunpack.c.h.b16 %v143
    %v715 = vunpack.c.l.b16 %v144
    %v716 = vunpack.c.h.b16 %v144
    %v717 = vunpack.c.l.b16 %v145
    %v718 = vunpack.c.h.b16 %v145
    %v719 = vunpack.c.l.b16 %v146
    %v720 = vunpack.c.h.b16 %v146
    %v721 = vunpack.c.l.b16 %v147
    %v722 = vunpack.c.h.b16 %v147
    %v723 = vunpack.c.l.b16 %v148
    %v724 = vunpack.c.h.b16 %v148
    %v725 = vunpack.c.l.b16 %v149
    %v726 = vunpack.c.h.b16 %v149
    %v727 = vunpack.c.l.b16 %v150
    %v728 = vunpack.c.h.b16 %v150
    %v729 = vunpack.c.l.b16 %v151
    %v730 = vunpack.c.h.b16 %v151
    %v731 = vunpack.c.l.b16 %v152
    %v732 = vunpack.c.h.b16 %v152
    %v733 = vunpack.c.l.b16 %v153
    %v734 = vunpack.c.h.b16 %v153
    %v735 = vunpack.c.l.b16 %v154
    %v736 = vunpack.c.h.b16 %v154
    %v737 = vunpack.c.l.b16 %v155
    %v738 = vunpack.c.h.b16 %v155
    %v739 = vunpack.c.l.b16 %v156
    %v740 = vunpack.c.h.b16 %v156
    %v741 = vunpack.c.l.b16 %v157
    %v742 = vunpack.c.h.b16 %v157
    %v743 = vunpack.c.l.b16 %v158
    %v744 = vunpack.c.h.b16 %v158
    %v745 = vunpack.c.l.b16 %v159
    %v746 = vunpack.c.h.b16 %v159
    %v747 = vunpack.c.l.b16 %v160
    %v748 = vunpack.c.h.b16 %v160
    %v749 = vunpack.c.l.b16 %v161
    %v750 = vunpack.c.h.b16 %v161
    %v751 = vunpack.c.l.b16 %v162
    %v752 = vunpack.c.h.b16 %v162
    %v753 = vunpack.c.l.b16 %v163
    %v754 = vunpack.c.h.b16 %v163
    %v755 = vunpack.c.l.b16 %v164
    %v756 = vunpack.c.h.b16 %v164
    %v757 = vunpack.c.l.b16 %v165
    %v758 = vunpack.c.h.b16 %v165
    %v759 = vunpack.c.l.b16 %v166
    %v760 = vunpack.c.h.b16 %v166
    %v761 = vunpack.c.l.b16 %v167
    %v762 = vunpack.c.h.b16 %v167
    %v763 = vunpack.c.l.b16 %v168
    %v764 = vunpack.c.h.b16 %v168
    %v765 = vunpack.c.l.b16 %v169
    %v766 = vunpack.c.h.b16 %v169
    %v767 = vunpack.c.l.b16 %v170
    %v768 = vunpack.c.h.b16 %v170
    %v769 = vunpack.c.l.b16 %v171
    %v770 = vunpack.c.h.b16 %v171
    %v771 = vunpack.c.l.b16 %v172
    %v772 = vunpack.c.h.b16 %v172
    %v773 = vunpack.c.l.b16 %v173
    %v774 = vunpack.c.h.b16 %v173
    %v775 = vunpack.c.l.b16 %v174
    %v776 = vunpack.c.h.b16 %v174
    %v777 = vunpack.c.l.b16 %v175
    %v778 = vunpack.c.h.b16 %v175
    %v779 = vunpack.c.l.b16 %v176
    %v780 = vunpack.c.h.b16 %v176
    %v781 = vunpack.c.l.b16 %v177
    %v782 = vunpack.c.h.b16 %v177
    %v783 = vunpack.c.l.b16 %v178
    %v784 = vunpack.c.h.b16 %v178
    %v785 = vunpack.c.l.b16 %v179
    %v786 = vunpack.c.h.b16 %v179
    %v787 = vunpack.c.l.b16 %v180
    %v788 = vunpack.c.h.b16 %v180
    %v789 = vunpack.c.l.b16 %v181
    %v790 = vunpack.c.h.b16 %v181
    %v791 = vunpack.c.l.b16 %v182
    %v792 = vunpack.c.h.b16 %v182
    %v793 = vunpack.c.l.b16 %v183
    %v794 = vunpack.c.h.b16 %v183
    %v795 = vunpack.c.l.b16 %v184
    %v796 = vunpack.c.h.b16 %v184
    %v797 = vunpack.c.l.b16 %v185
    %v798 = vunpack.c.h.b16 %v185
    %v799 = vunpack.c.l.b16 %v186
    %v800 = vunpack.c.h.b16 %v186
    %v801 = vunpack.c.l.b16 %v187
    %v802 = vunpack.c.h.b16 %v187
    %v803 = vunpack.c.l.b16 %v188
    %v804 = vunpack.c.h.b16 %v188
    %v805 = vunpack.c.l.b16 %v189
    %v806 = vunpack.c.h.b16 %v189
    %v807 = vunpack.c.l.b16 %v190
    %v808 = vunpack.c.h.b16 %v190
    %v809 = vunpack.c.l.b16 %v191
    %v810 = vunpack.c.h.b16 %v191
    %v811 = vunpack.c.l.b16 %v192
    %v812 = vunpack.c.h.b16 %v192
    %v813 = vunpack.c.l.b16 %v193
    %v814 = vunpack.c.h.b16 %v193
    %v815 = vunpack.c.l.b16 %v194
    %v816 = vunpack.c.h.b16 %v194
    %v817 = vunpack.c.l.b16 %v195
    %v818 = vunpack.c.h.b16 %v195
    %v819 = vunpack.c.l.b16 %v196
    %v820 = vunpack.c.h.b16 %v196
    %v821 = vunpack.c.l.b16 %v197
    %v822 = vunpack.c.h.b16 %v197
    %v823 = vunpack.c.l.b16 %v198
    %v824 = vunpack.c.h.b16 %v198
    %v825 = vunpack.c.l.b16 %v199
    %v826 = vunpack.c.h.b16 %v199
    %v827 = vunpack.c.l.b16 %v200
    %v828 = vunpack.c.h.b16 %v200
    %v829 = vunpack.c.l.b16 %v201
    %v830 = vunpack.c.h.b16 %v201
    %v831 = vunpack.c.l.b16 %v202
    %v832 = vunpack.c.h.b16 %v202
    %v833 = vunpack.c.l.b16 %v203
    %v834 = vunpack.c.h.b16 %v203
    %v835 = vunpack.c.l.b16 %v204
    %v836 = vunpack.c.h.b16 %v204
    %v837 = vunpack.c.l.b16 %v205
    %v838 = vunpack.c.h.b16 %v205
    %v839 = vunpack.c.l.b16 %v206
    %v840 = vunpack.c.h.b16 %v206
    %v841 = vunpack.c.l.b16 %v207
    %v842 = vunpack.c.h.b16 %v207
    %v843 = vunpack.c.l.b16 %v208
    %v844 = vunpack.c.h.b16 %v208
    %v845 = vunpack.c.l.b16 %v209
    %v846 = vunpack.c.h.b16 %v209
    %v847 = vunpack.c.l.b16 %v210
    %v848 = vunpack.c.h.b16 %v210
    %v849 = vunpack.c.l.b16 %v211
    %v850 = vunpack.c.h.b16 %v211
    %v851 = vunpack.c.l.b16 %v212
    %v852 = vunpack.c.h.b16 %v212
    %v853 = vunpack.c.l.b16 %v213
    %v854 = vunpack.c.h.b16 %v213
    %v855 = vunpack.c.l.b16 %v214
    %v856 = vunpack.c.h.b16 %v214
    %v857 = vunpack.c.l.b16 %v215
    %v858 = vunpack.c.h.b16 %v215
    %v859 = vunpack.c.l.b16 %v216
    %v860 = vunpack.c.h.b16 %v216
    %v861 = vunpack.c.l.b16 %v217
    %v862 = vunpack.c.h.b16 %v217
    %v863 = vunpack.c.l.b16 %v218
    %v864 = vunpack.c.h.b16 %v218
    %v865 = vunpack.c.l.b16 %v219
    %v866 = vunpack.c.h.b16 %v219
    %v867 = vunpack.c.l.b16 %v220
    %v868 = vunpack.c.h.b16 %v220
    %v869 = vunpack.c.l.b16 %v221
    %v870 = vunpack.c.h.b16 %v221
    %v871 = vunpack.c.l.b16 %v222
    %v872 = vunpack.c.h.b16 %v222
    %v873 = vunpack.c.l.b16 %v223
    %v874 = vunpack.c.h.b16 %v223
    %v875 = vunpack.c.l.b16 %v224
    %v876 = vunpack.c.h.b16 %v224
    %v877 = vunpack.c.l.b16 %v225
    %v878 = vunpack.c.h.b16 %v225
    %v879 = vunpack.c.l.b16 %v226
    %v880 = vunpack.c.h.b16 %v226
    %v881 = vunpack.c.l.b16 %v227
    %v882 = vunpack.c.h.b16 %v227
    %v883 = vunpack.c.l.b16 %v228
    %v884 = vunpack.c.h.b16 %v228
    %v885 = vunpack.c.l.b16 %v229
    %v886 = vunpack.c.h.b16 %v229
    %v887 = vunpack.c.l.b16 %v230
    %v888 = vunpack.c.h.b16 %v230
    %v889 = vunpack.c.l.b16 %v231
    %v890 = vunpack.c.h.b16 %v231
    %v891 = vunpack.c.l.b16 %v232
    %v892 = vunpack.c.h.b16 %v232
    %v893 = vunpack.c.l.b16 %v233
    %v894 = vunpack.c.h.b16 %v233
    %v895 = vunpack.c.l.b16 %v234
    %v896 = vunpack.c.h.b16 %v234
    %v897 = vunpack.c.l.b16 %v235
    %v898 = vunpack.c.h.b16 %v235
    %v899 = vunpack.c.l.b16 %v236
    %v900 = vunpack.c.h.b16 %v236
    %v901 = vunpack.c.l.b16 %v237
    %v902 = vunpack.c.h.b16 %v237
    %v903 = vunpack.c.l.b16 %v238
    %v904 = vunpack.c.h.b16 %v238
    %v905 = vunpack.c.l.b16 %v239
    %v906 = vunpack.c.h.b16 %v239
    %v907 = vunpack.c.l.b16 %v240
    %v908 = vunpack.c.h.b16 %v240
    %v909 = vunpack.c.l.b16 %v241
    %v910 = vunpack.c.h.b16 %v241
    %v911 = vunpack.c.l.b16 %v242
    %v912 = vunpack.c.h.b16 %v242
    %v913 = vunpack.c.l.b16 %v243
    %v914 = vunpack.c.h.b16 %v243
    %v915 = vunpack.c.l.b16 %v244
    %v916 = vunpack.c.h.b16 %v244
    %v917 = vunpack.c.l.b16 %v245
    %v918 = vunpack.c.h.b16 %v245
    %v919 = vunpack.c.l.b16 %v246
    %v920 = vunpack.c.h.b16 %v246
    %v921 = vunpack.c.l.b16 %v247
    %v922 = vunpack.c.h.b16 %v247
    %v923 = vunpack.c.l.b16 %v248
    %v924 = vunpack.c.h.b16 %v248
    %v925 = vunpack.c.l.b16 %v249
    %v926 = vunpack.c.h.b16 %v249
    %v927 = vunpack.c.l.b16 %v250
    %v928 = vunpack.c.h.b16 %v250
    %v929 = vunpack.c.l.b16 %v251
    %v930 = vunpack.c.h.b16 %v251
    %v931 = vunpack.c.l.b16 %v252
    %v932 = vunpack.c.h.b16 %v252
    %v933 = vunpack.c.l.b16 %v253
    %v934 = vunpack.c.h.b16 %v253
    %v935 = vunpack.c.l.b16 %v254
    %v936 = vunpack.c.h.b16 %v254
    %v937 = vunpack.c.l.b16 %v255
    %v938 = vunpack.c.h.b16 %v255
    %v939 = vunpack.c.l.b16 %v256
    %v940 = vunpack.c.h.b16 %v256
    %v941 = vunpack.c.l.b16 %v257
    %v942 = vunpack.c.h.b16 %v257
    %v943 = vunpack.c.l.b16 %v258
    %v944 = vunpack.c.h.b16 %v258
    %v945 = vunpack.c.l.b16 %v259
    %v946 = vunpack.c.h.b16 %v259
    %v947 = vunpack.c.l.b16 %v260
    %v948 = vunpack.c.h.b16 %v260
    %v949 = vunpack.c.l.b16 %v261
    %v950 = vunpack.c.h.b16 %v261
    %v951 = vunpack.c.l.b16 %v262
    %v952 = vunpack.c.h.b16 %v262
    %v953 = vunpack.c.l.b16 %v263
    %v954 = vunpack.c.h.b16 %v263
    %v955 = vunpack.c.l.b16 %v264
    %v956 = vunpack.c.h.b16 %v264
    %v957 = vunpack.c.l.b16 %v265
    %v958 = vunpack.c.h.b16 %v265
    %v959 = vunpack.c.l.b16 %v266
    %v960 = vunpack.c.h.b16 %v266
    %v961 = vunpack.c.l.b16 %v267
    %v962 = vunpack.c.h.b16 %v267
    %v963 = vunpack.c.l.b16 %v268
    %v964 = vunpack.c.h.b16 %v268
    %v965 = vunpack.c.l.b16 %v269
    %v966 = vunpack.c.h.b16 %v269
    %v967 = vunpack.c.l.b16 %v270
    %v968 = vunpack.c.h.b16 %v270
    %v969 = vunpack.c.l.b16 %v271
    %v970 = vunpack.c.h.b16 %v271
    %v971 = vunpack.c.l.b16 %v272
    %v972 = vunpack.c.h.b16 %v272
    %v973 = vunpack.c.l.b16 %v273
    %v974 = vunpack.c.h.b16 %v273
    %v975 = vunpack.c.l.b16 %v274
    %v976 = vunpack.c.h.b16 %v274
    %v977 = vunpack.c.l.b16 %v275
    %v978 = vunpack.c.h.b16 %v275
    %v979 = vunpack.c.l.b16 %v276
    %v980 = vunpack.c.h.b16 %v276
    %v981 = vunpack.c.l.b16 %v277
    %v982 = vunpack.c.h.b16 %v277
    %v983 = vunpack.c.l.b16 %v278
    %v984 = vunpack.c.h.b16 %v278
    %v985 = vunpack.c.l.b16 %v279
    %v986 = vunpack.c.h.b16 %v279
    %v987 = vunpack.c.l.b16 %v280
    %v988 = vunpack.c.h.b16 %v280
    %v989 = vunpack.c.l.b16 %v281
    %v990 = vunpack.c.h.b16 %v281
    %v991 = vunpack.c.l.b16 %v282
    %v992 = vunpack.c.h.b16 %v282
    %v993 = vunpack.c.l.b16 %v283
    %v994 = vunpack.c.h.b16 %v283
    %v995 = vunpack.c.l.b16 %v284
    %v996 = vunpack.c.h.b16 %v284
    %v997 = vunpack.c.l.b16 %v285
    %v998 = vunpack.c.h.b16 %v285
    %v999 = vunpack.c.l.b16 %v286
    %v1000 = vunpack.c.h.b16 %v286
    %v1001 = vunpack.c.l.b16 %v287
    %v1002 = vunpack.c.h.b16 %v287
    %v1003 = vunpack.c.l.b16 %v288
    %v1004 = vunpack.c.h.b16 %v288
    %v1005 = vunpack.c.l.b16 %v289
    %v1006 = vunpack.c.h.b16 %v289
    %v1007 = vunpack.c.l.b16 %v290
    %v1008 = vunpack.c.h.b16 %v290
    %v1009 = vunpack.c.l.b16 %v291
    %v1010 = vunpack.c.h.b16 %v291
    %v1011 = vunpack.c.l.b16 %v292
    %v1012 = vunpack.c.h.b16 %v292
    %v1013 = vunpack.c.l.b16 %v293
    %v1014 = vunpack.c.h.b16 %v293
    %v1015 = vunpack.c.l.b16 %v294
    %v1016 = vunpack.c.h.b16 %v294
    %v1017 = vunpack.c.l.b16 %v295
    %v1018 = vunpack.c.h.b16 %v295
    %v1019 = vunpack.c.l.b16 %v296
    %v1020 = vunpack.c.h.b16 %v296
    %v1021 = vunpack.c.l.b16 %v297
    %v1022 = vunpack.c.h.b16 %v297
    %v1023 = vunpack.c.l.b16 %v298
    %v1024 = vunpack.c.h.b16 %v298
    %v1025 = vunpack.c.l.b16 %v299
    %v1026 = vunpack.c.h.b16 %v299
    %v1027 = vunpack.c.l.b16 %v300
    %v1028 = vunpack.c.h.b16 %v300
    %v1029 = vunpack.c.l.b16 %v301
    %v1030 = vunpack.c.h.b16 %v301
    %v1031 = vunpack.c.l.b16 %v302
    %v1032 = vunpack.c.h.b16 %v302
    %v1033 = vunpack.c.l.b16 %v303
    %v1034 = vunpack.c.h.b16 %v303
    %v1035 = vunpack.c.l.b16 %v304
    %v1036 = vunpack.c.h.b16 %v304
    %v1037 = vunpack.c.l.b16 %v305
    %v1038 = vunpack.c.h.b16 %v305
    %v1039 = vunpack.c.l.b16 %v306
    %v1040 = vunpack.c.h.b16 %v306
    %v1041 = vunpack.c.l.b16 %v307
    %v1042 = vunpack.c.h.b16 %v307
    %v1043 = vunpack.c.l.b16 %v308
    %v1044 = vunpack.c.h.b16 %v308
    %v1045 = vunpack.c.l.b16 %v309
    %v1046 = vunpack.c.h.b16 %v309
    %v1047 = vunpack.c.l.b16 %v310
    %v1048 = vunpack.c.h.b16 %v310
    %v1049 = vunpack.c.l.b16 %v311
    %v1050 = vunpack.c.h.b16 %v311
    %v1051 = vunpack.c.l.b16 %v312
    %v1052 = vunpack.c.h.b16 %v312
    %v1053 = vunpack.c.l.b16 %v313
    %v1054 = vunpack.c.h.b16 %v313
    %v1055 = vunpack.c.l.b16 %v314
    %v1056 = vunpack.c.h.b16 %v314
    %v1057 = vunpack.c.l.b16 %v315
    %v1058 = vunpack.c.h.b16 %v315
    %v1059 = vunpack.c.l.b16 %v316
    %v1060 = vunpack.c.h.b16 %v316
    %v1061 = vunpack.c.l.b16 %v317
    %v1062 = vunpack.c.h.b16 %v317
    %v1063 = vunpack.c.l.b16 %v318
    %v1064 = vunpack.c.h.b16 %v318
    %v1065 = vunpack.c.l.b16 %v319
    %v1066 = vunpack.c.h.b16 %v319
    %v1067 = vunpack.c.l.b16 %v320
    %v1068 = vunpack.c.h.b16 %v320
    %v1069 = vunpack.c.l.b16 %v321
    %v1070 = vunpack.c.h.b16 %v321
    %v1071 = vunpack.c.l.b16 %v322
    %v1072 = vunpack.c.h.b16 %v322
    %v1073 = vunpack.c.l.b16 %v323
    %v1074 = vunpack.c.h.b16 %v323
    %v1075 = vunpack.c.l.b16 %v324
    %v1076 = vunpack.c.h.b16 %v324
    %v1077 = vunpack.c.l.b16 %v325
    %v1078 = vunpack.c.h.b16 %v325
    %v1079 = vunpack.c.l.b16 %v326
    %v1080 = vunpack.c.h.b16 %v326
    %v1081 = vunpack.c.l.b16 %v327
    %v1082 = vunpack.c.h.b16 %v327
    %v1083 = vunpack.c.l.b16 %v328
    %v1084 = vunpack.c.h.b16 %v328
    %v1085 = vunpack.c.l.b16 %v329
    %v1086 = vunpack.c.h.b16 %v329
    %v1087 = vunpack.c.l.b16 %v330
    %v1088 = vunpack.c.h.b16 %v330
    %v1089 = vunpack.c.l.b16 %v331
    %v1090 = vunpack.c.h.b16 %v331
    %v1091 = vunpack.c.l.b16 %v332
    %v1092 = vunpack.c.h.b16 %v332
    %v1093 = vunpack.c.l.b16 %v333
    %v1094 = vunpack.c.h.b16 %v333
    %v1095 = vunpack.c.l.b16 %v334
    %v1096 = vunpack.c.h.b16 %v334
    %v1097 = vunpack.c.l.b16 %v335
    %v1098 = vunpack.c.h.b16 %v335
    %v1099 = vunpack.c.l.b16 %v336
    %v1100 = vunpack.c.h.b16 %v336
    %v1101 = vunpack.c.l.b16 %v337
    %v1102 = vunpack.c.h.b16 %v337
    %v1103 = vunpack.c.l.b16 %v338
    %v1104 = vunpack.c.h.b16 %v338
    %v1105 = vunpack.c.l.b16 %v339
    %v1106 = vunpack.c.h.b16 %v339
    %v1107 = vunpack.c.l.b16 %v340
    %v1108 = vunpack.c.h.b16 %v340
    %v1109 = vunpack.c.l.b16 %v341
    %v1110 = vunpack.c.h.b16 %v341
    %v1111 = vunpack.c.l.b16 %v342
    %v1112 = vunpack.c.h.b16 %v342
    %v1113 = vunpack.c.l.b16 %v343
    %v1114 = vunpack.c.h.b16 %v343
    %v1115 = vunpack.c.l.b16 %v344
    %v1116 = vunpack.c.h.b16 %v344
    %v1117 = vunpack.c.l.b16 %v345
    %v1118 = vunpack.c.h.b16 %v345
    %v1119 = vunpack.c.l.b16 %v346
    %v1120 = vunpack.c.h.b16 %v346
    %v1121 = vunpack.c.l.b16 %v347
    %v1122 = vunpack.c.h.b16 %v347
    %v1123 = vunpack.c.l.b16 %v348
    %v1124 = vunpack.c.h.b16 %v348
    %v1125 = vunpack.c.l.b16 %v349
    %v1126 = vunpack.c.h.b16 %v349
    %v1127 = vunpack.c.l.b16 %v350
    %v1128 = vunpack.c.h.b16 %v350
    %v1129 = vunpack.c.l.b16 %v351
    %v1130 = vunpack.c.h.b16 %v351
    %v1131 = vunpack.c.l.b16 %v352
    %v1132 = vunpack.c.h.b16 %v352
    %v1133 = vunpack.c.l.b16 %v353
    %v1134 = vunpack.c.h.b16 %v353
    %v1135 = vunpack.c.l.b16 %v354
    %v1136 = vunpack.c.h.b16 %v354
    %v1137 = vunpack.c.l.b16 %v355
    %v1138 = vunpack.c.h.b16 %v355
    %v1139 = vunpack.c.l.b16 %v356
    %v1140 = vunpack.c.h.b16 %v356
    %v1141 = vunpack.c.l.b16 %v357
    %v1142 = vunpack.c.h.b16 %v357
    %v1143 = vunpack.c.l.b16 %v358
    %v1144 = vunpack.c.h.b16 %v358
    %v1145 = vunpack.c.l.b16 %v359
    %v1146 = vunpack.c.h.b16 %v359
    %v1147 = vunpack.c.l.b16 %v360
    %v1148 = vunpack.c.h.b16 %v360
    %v1149 = vunpack.c.l.b16 %v361
    %v1150 = vunpack.c.h.b16 %v361
    %v1151 = vunpack.c.l.b16 %v362
    %v1152 = vunpack.c.h.b16 %v362
    %v1153 = vunpack.c.l.b16 %v363
    %v1154 = vunpack.c.h.b16 %v363
    %v1155 = vunpack.c.l.b16 %v364
    %v1156 = vunpack.c.h.b16 %v364
    %v1157 = vunpack.c.l.b16 %v365
    %v1158 = vunpack.c.h.b16 %v365
    %v1159 = vunpack.c.l.b16 %v366
    %v1160 = vunpack.c.h.b16 %v366
    %v1161 = vunpack.c.l.b16 %v367
    %v1162 = vunpack.c.h.b16 %v367
    %v1163 = vunpack.c.l.b16 %v368
    %v1164 = vunpack.c.h.b16 %v368
    %v1165 = vunpack.c.l.b16 %v369
    %v1166 = vunpack.c.h.b16 %v369
    %v1167 = vunpack.c.l.b16 %v370
    %v1168 = vunpack.c.h.b16 %v370
    %v1169 = vunpack.c.l.b16 %v371
    %v1170 = vunpack.c.h.b16 %v371
    %v1171 = vunpack.c.l.b16 %v372
    %v1172 = vunpack.c.h.b16 %v372
    %v1173 = vunpack.c.l.b16 %v373
    %v1174 = vunpack.c.h.b16 %v373
    %v1175 = vunpack.c.l.b16 %v374
    %v1176 = vunpack.c.h.b16 %v374
    %v1177 = vunpack.c.l.b16 %v375
    %v1178 = vunpack.c.h.b16 %v375
    %v1179 = vunpack.c.l.b16 %v376
    %v1180 = vunpack.c.h.b16 %v376
    %v1181 = vunpack.c.l.b16 %v377
    %v1182 = vunpack.c.h.b16 %v377
    %v1183 = vunpack.c.l.b16 %v378
    %v1184 = vunpack.c.h.b16 %v378
    %v1185 = vunpack.c.l.b16 %v379
    %v1186 = vunpack.c.h.b16 %v379
    %v1187 = vunpack.c.l.b16 %v380
    %v1188 = vunpack.c.h.b16 %v380
    %v1189 = vunpack.c.l.b16 %v381
    %v1190 = vunpack.c.h.b16 %v381
    %v1191 = vunpack.c.l.b16 %v382
    %v1192 = vunpack.c.h.b16 %v382
    %v1193 = vpack.c.b16 %v689, %v681
    %v1194 = vpack.c.b16 %v690, %v682
    %v1195 = vpack.c.b16 %v691, %v683
    %v1196 = vpack.c.b16 %v692, %v684
    %v1197 = vpack.c.b16 %v693, %v685
    %v1198 = vpack.c.b16 %v694, %v686
    %v1199 = vpack.c.b16 %v695, %v687
    %v1200 = vpack.c.b16 %v696, %v688
    %v1201 = vpack.c.b16 %v705, %v697
    %v1202 = vpack.c.b16 %v706, %v698
    %v1203 = vpack.c.b16 %v707, %v699
    %v1204 = vpack.c.b16 %v708, %v700
    %v1205 = vpack.c.b16 %v709, %v701
    %v1206 = vpack.c.b16 %v710, %v702
    %v1207 = vpack.c.b16 %v711, %v703
    %v1208 = vpack.c.b16 %v712, %v704
    %v1209 = vpack.c.b16 %v721, %v713
    %v1210 = vpack.c.b16 %v722, %v714
    %v1211 = vpack.c.b16 %v723, %v715
    %v1212 = vpack.c.b16 %v724, %v716
    %v1213 = vpack.c.b16 %v725, %v717
    %v1214 = vpack.c.b16 %v726, %v718
    %v1215 = vpack.c.b16 %v727, %v719
    %v1216 = vpack.c.b16 %v728, %v720
    %v1217 = vpack.c.b16 %v737, %v729
    %v1218 = vpack.c.b16 %v738, %v730
    %v1219 = vpack.c.b16 %v739, %v731
    %v1220 = vpack.c.b16 %v740, %v732
    %v1221 = vpack.c.b16 %v741, %v733
    %v1222 = vpack.c.b16 %v742, %v734
    %v1223 = vpack.c.b16 %v743, %v735
    %v1224 = vpack.c.b16 %v744, %v736
    %v1225 = vpack.c.b16 %v753, %v745
    %v1226 = vpack.c.b16 %v754, %v746
    %v1227 = vpack.c.b16 %v755, %v747
    %v1228 = vpack.c.b16 %v756, %v748
    %v1229 = vpack.c.b16 %v757, %v749
    %v1230 = vpack.c.b16 %v758, %v750
    %v1231 = vpack.c.b16 %v759, %v751
    %v1232 = vpack.c.b16 %v760, %v752
    %v1233 = vpack.c.b16 %v769, %v761
    %v1234 = vpack.c.b16 %v770, %v762
    %v1235 = vpack.c.b16 %v771, %v763
    %v1236 = vpack.c.b16 %v772, %v764
    %v1237 = vpack.c.b16 %v773, %v765
    %v1238 = vpack.c.b16 %v774, %v766
    %v1239 = vpack.c.b16 %v775, %v767
    %v1240 = vpack.c.b16 %v776, %v768
    %v1241 = vpack.c.b16 %v785, %v777
    %v1242 = vpack.c.b16 %v786, %v778
    %v1243 = vpack.c.b16 %v787, %v779
    %v1244 = vpack.c.b16 %v788, %v780
    %v1245 = vpack.c.b16 %v789, %v781
    %v1246 = vpack.c.b16 %v790, %v782
    %v1247 = vpack.c.b16 %v791, %v783
    %v1248 = vpack.c.b16 %v792, %v784
    %v1249 = vpack.c.b16 %v801, %v793
    %v1250 = vpack.c.b16 %v802, %v794
    %v1251 = vpack.c.b16 %v803, %v795
    %v1252 = vpack.c.b16 %v804, %v796
    %v1253 = vpack.c.b16 %v805, %v797
    %v1254 = vpack.c.b16 %v806, %v798
    %v1255 = vpack.c.b16 %v807, %v799
    %v1256 = vpack.c.b16 %v808, %v800
    %v1257 = vpack.c.b16 %v817, %v809
    %v1258 = vpack.c.b16 %v818, %v810
    %v1259 = vpack.c.b16 %v819, %v811
    %v1260 = vpack.c.b16 %v820, %v812
    %v1261 = vpack.c.b16 %v821, %v813
    %v1262 = vpack.c.b16 %v822, %v814
    %v1263 = vpack.c.b16 %v823, %v815
    %v1264 = vpack.c.b16 %v824, %v816
    %v1265 = vpack.c.b16 %v833, %v825
    %v1266 = vpack.c.b16 %v834, %v826
    %v1267 = vpack.c.b16 %v835, %v827
    %v1268 = vpack.c.b16 %v836, %v828
    %v1269 = vpack.c.b16 %v837, %v829
    %v1270 = vpack.c.b16 %v838, %v830
    %v1271 = vpack.c.b16 %v839, %v831
    %v1272 = vpack.c.b16 %v840, %v832
    %v1273 = vpack.c.b16 %v849, %v841
    %v1274 = vpack.c.b16 %v850, %v842
    %v1275 = vpack.c.b16 %v851, %v843
    %v1276 = vpack.c.b16 %v852, %v844
    %v1277 = vpack.c.b16 %v853, %v845
    %v1278 = vpack.c.b16 %v854, %v846
    %v1279 = vpack.c.b16 %v855, %v847
    %v1280 = vpack.c.b16 %v856, %v848
    %v1281 = vpack.c.b16 %v865, %v857
    %v1282 = vpack.c.b16 %v866, %v858
    %v1283 = vpack.c.b16 %v867, %v859
    %v1284 = vpack.c.b16 %v868, %v860
    %v1285 = vpack.c.b16 %v869, %v861
    %v1286 = vpack.c.b16 %v870, %v862
    %v1287 = vpack.c.b16 %v871, %v863
    %v1288 = vpack.c.b16 %v872, %v864
    %v1289 = vpack.c.b16 %v881, %v873
    %v1290 = vpack.c.b16 %v882, %v874
    %v1291 = vpack.c.b16 %v883, %v875
    %v1292 = vpack.c.b16 %v884, %v876
    %v1293 = vpack.c.b16 %v885, %v877
    %v1294 = vpack.c.b16 %v886, %v878
    %v1295 = vpack.c.b16 %v887, %v879
    %v1296 = vpack.c.b16 %v888, %v880
    %v1297 = vpack.c.b16 %v897, %v889
    %v1298 = vpack.c.b16 %v898, %v890
    %v1299 = vpack.c.b16 %v899, %v891
    %v1300 = vpack.c.b16 %v900, %v892
    %v1301 = vpack.c.b16 %v901, %v893
    %v1302 = vpack.c.b16 %v902, %v894
    %v1303 = vpack.c.b16 %v903, %v895
    %v1304 = vpack.c.b16 %v904, %v896
    %v1305 = vpack.c.b16 %v913, %v905
    %v1306 = vpack.c.b16 %v914, %v906
    %v1307 = vpack.c.b16 %v915, %v907
    %v1308 = vpack.c.b16 %v916, %v908
    %v1309 = vpack.c.b16 %v917, %v909
    %v1310 = vpack.c.b16 %v918, %v910
    %v1311 = vpack.c.b16 %v919, %v911
    %v1312 = vpack.c.b16 %v920, %v912
    %v1313 = vpack.c.b16 %v929, %v921
    %v1314 = vpack.c.b16 %v930, %v922
    %v1315 = vpack.c.b16 %v931, %v923
    %v1316 = vpack.c.b16 %v932, %v924
    %v1317 = vpack.c.b16 %v933, %v925
    %v1318 = vpack.c.b16 %v934, %v926
    %v1319 = vpack.c.b16 %v935, %v927
    %v1320 = vpack.c.b16 %v936, %v928
    %v1321 = vpack.c.b16 %v945, %v937
    %v1322 = vpack.c.b16 %v946, %v938
    %v1323 = vpack.c.b16 %v947, %v939
    %v1324 = vpack.c.b16 %v948, %v940
    %v1325 = vpack.c.b16 %v949, %v941
    %v1326 = vpack.c.b16 %v950, %v942
    %v1327 = vpack.c.b16 %v951, %v943
    %v1328 = vpack.c.b16 %v952, %v944
    %v1329 = vpack.c.b16 %v961, %v953
    %v1330 = vpack.c.b16 %v962, %v954
    %v1331 = vpack.c.b16 %v963, %v955
    %v1332 = vpack.c.b16 %v964, %v956
    %v1333 = vpack.c.b16 %v965, %v957
    %v1334 = vpack.c.b16 %v966, %v958
    %v1335 = vpack.c.b16 %v967, %v959
    %v1336 = vpack.c.b16 %v968, %v960
    %v1337 = vpack.c.b16 %v977, %v969
    %v1338 = vpack.c.b16 %v978, %v970
    %v1339 = vpack.c.b16 %v979, %v971
    %v1340 = vpack.c.b16 %v980, %v972
    %v1341 = vpack.c.b16 %v981, %v973
    %v1342 = vpack.c.b16 %v982, %v974
    %v1343 = vpack.c.b16 %v983, %v975
    %v1344 = vpack.c.b16 %v984, %v976
    %v1345 = vpack.c.b16 %v993, %v985
    %v1346 = vpack.c.b16 %v994, %v986
    %v1347 = vpack.c.b16 %v995, %v987
    %v1348 = vpack.c.b16 %v996, %v988
    %v1349 = vpack.c.b16 %v997, %v989
    %v1350 = vpack.c.b16 %v998, %v990
    %v1351 = vpack.c.b16 %v999, %v991
    %v1352 = vpack.c.b16 %v1000, %v992
    %v1353 = vpack.c.b16 %v1009, %v1001
    %v1354 = vpack.c.b16 %v1010, %v1002
    %v1355 = vpack.c.b16 %v1011, %v1003
    %v1356 = vpack.c.b16 %v1012, %v1004
    %v1357 = vpack.c.b16 %v1013, %v1005
    %v1358 = vpack.c.b16 %v1014, %v1006
    %v1359 = vpack.c.b16 %v1015, %v1007
    %v1360 = vpack.c.b16 %v1016, %v1008
    %v1361 = vpack.c.b16 %v1025, %v1017
    %v1362 = vpack.c.b16 %v1026, %v1018
    %v1363 = vpack.c.b16 %v1027, %v1019
    %v1364 = vpack.c.b16 %v1028, %v1020
    %v1365 = vpack.c.b16 %v1029, %v1021
    %v1366 = vpack.c.b16 %v1030, %v1022
    %v1367 = vpack.c.b16 %v1031, %v1023
    %v1368 = vpack.c.b16 %v1032, %v1024
    %v1369 = vpack.c.b16 %v1041, %v1033
    %v1370 = vpack.c.b16 %v1042, %v1034
    %v1371 = vpack.c.b16 %v1043, %v1035
    %v1372 = vpack.c.b16 %v1044, %v1036
    %v1373 = vpack.c.b16 %v1045, %v1037
    %v1374 = vpack.c.b16 %v1046, %v1038
    %v1375 = vpack.c.b16 %v1047, %v1039
    %v1376 = vpack.c.b16 %v1048, %v1040
    %v1377 = vpack.c.b16 %v1057, %v1049
    %v1378 = vpack.c.b16 %v1058, %v1050
    %v1379 = vpack.c.b16 %v1059, %v1051
    %v1380 = vpack.c.b16 %v1060, %v1052
    %v1381 = vpack.c.b16 %v1061, %v1053
    %v1382 = vpack.c.b16 %v1062, %v1054
    %v1383 = vpack.c.b16 %v1063, %v1055
    %v1384 = vpack.c.b16 %v1064, %v1056
    %v1385 = vpack.c.b16 %v1073, %v1065
    %v1386 = vpack.c.b16 %v1074, %v1066
    %v1387 = vpack.c.b16 %v1075, %v1067
    %v1388 = vpack.c.b16 %v1076, %v1068
    %v1389 = vpack.c.b16 %v1077, %v1069
    %v1390 = vpack.c.b16 %v1078, %v1070
    %v1391 = vpack.c.b16 %v1079, %v1071
    %v1392 = vpack.c.b16 %v1080, %v1072
    %v1393 = vpack.c.b16 %v1089, %v1081
    %v1394 = vpack.c.b16 %v1090, %v1082
    %v1395 = vpack.c.b16 %v1091, %v1083
    %v1396 = vpack.c.b16 %v1092, %v1084
    %v1397 = vpack.c.b16 %v1093, %v1085
    %v1398 = vpack.c.b16 %v1094, %v1086
    %v1399 = vpack.c.b16 %v1095, %v1087
    %v1400 = vpack.c.b16 %v1096, %v1088
    %v1401 = vpack.c.b16 %v1105, %v1097
    %v1402 = vpack.c.b16 %v1106, %v1098
    %v1403 = vpack.c.b16 %v1107, %v1099
    %v1404 = vpack.c.b16 %v1108, %v1100
    %v1405 = vpack.c.b16 %v1109, %v1101
    %v1406 = vpack.c.b16 %v1110, %v1102
    %v1407 = vpack.c.b16 %v1111, %v1103
    %v1408 = vpack.c.b16 %v1112, %v1104
    %v1409 = vpack.c.b16 %v1121, %v1113
    %v1410 = vpack.c.b16 %v1122, %v1114
    %v1411 = vpack.c.b16 %v1123, %v1115
    %v1412 = vpack.c.b16 %v1124, %v1116
    %v1413 = vpack.c.b16 %v1125, %v1117
    %v1414 = vpack.c.b16 %v1126, %v1118
    %v1415 = vpack.c.b16 %v1127, %v1119
    %v1416 = vpack.c.b16 %v1128, %v1120
    %v1417 = vpack.c.b16 %v1137, %v1129
    %v1418 = vpack.c.b16 %v1138, %v1130
    %v1419 = vpack.c.b16 %v1139, %v1131
    %v1420 = vpack.c.b16 %v1140, %v1132
    %v1421 = vpack.c.b16 %v1141, %v1133
    %v1422 = vpack.c.b16 %v1142, %v1134
    %v1423 = vpack.c.b16 %v1143, %v1135
    %v1424 = vpack.c.b16 %v1144, %v1136
    %v1425 = vpack.c.b16 %v1153, %v1145
    %v1426 = vpack.c.b16 %v1154, %v1146
    %v1427 = vpack.c.b16 %v1155, %v1147
    %v1428 = vpack.c.b16 %v1156, %v1148
    %v1429 = vpack.c.b16 %v1157, %v1149
    %v1430 = vpack.c.b16 %v1158, %v1150
    %v1431 = vpack.c.b16 %v1159, %v1151
    %v1432 = vpack.c.b16 %v1160, %v1152
    %v1433 = vpack.c.b16 %v1169, %v1161
    %v1434 = vpack.c.b16 %v1170, %v1162
    %v1435 = vpack.c.b16 %v1171, %v1163
    %v1436 = vpack.c.b16 %v1172, %v1164
    %v1437 = vpack.c.b16 %v1173, %v1165
    %v1438 = vpack.c.b16 %v1174, %v1166
    %v1439 = vpack.c.b16 %v1175, %v1167
    %v1440 = vpack.c.b16 %v1176, %v1168
    %v1441 = vpack.c.b16 %v1185, %v1177
    %v1442 = vpack.c.b16 %v1186, %v1178
    %v1443 = vpack.c.b16 %v1187, %v1179
    %v1444 = vpack.c.b16 %v1188, %v1180
    %v1445 = vpack.c.b16 %v1189, %v1181
    %v1446 = vpack.c.b16 %v1190, %v1182
    %v1447 = vpack.c.b16 %v1191, %v1183
    %v1448 = vpack.c.b16 %v1192, %v1184
    %1705 = vmatprep.subr.bf16.mxu0 %v1194
    %1706 = vmatpush1.bf16.msra.mxu0 %v1193
    %1707 = vmatprep.subr.bf16.mxu0 %v1202
    %1708 = vmatpush1.bf16.msra.mxu0 %v1201
    %1709 = vmatprep.subr.bf16.mxu0 %v1210
    %1710 = vmatpush1.bf16.msra.mxu0 %v1209
    %1711 = vmatprep.subr.bf16.mxu0 %v1218
    %1712 = vmatpush1.bf16.msra.mxu0 %v1217
    %1713 = vmatprep.subr.bf16.mxu0 %v1226
    %1714 = vmatpush1.bf16.msra.mxu0 %v1225
    %1715 = vmatprep.subr.bf16.mxu0 %v1234
    %1716 = vmatpush1.bf16.msra.mxu0 %v1233
    %1717 = vmatprep.subr.bf16.mxu0 %v1242
    %1718 = vmatpush1.bf16.msra.mxu0 %v1241
    %1719 = vmatprep.subr.bf16.mxu0 %v1250
    %1720 = vmatpush1.bf16.msra.mxu0 %v1249
    %1721 = vmatprep.subr.bf16.mxu0 %v1258
    %1722 = vmatpush1.bf16.msra.mxu0 %v1257
    %1723 = vmatprep.subr.bf16.mxu0 %v1266
    %1724 = vmatpush1.bf16.msra.mxu0 %v1265
    %1725 = vmatprep.subr.bf16.mxu0 %v1274
    %1726 = vmatpush1.bf16.msra.mxu0 %v1273
    %1727 = vmatprep.subr.bf16.mxu0 %v1282
    %1728 = vmatpush1.bf16.msra.mxu0 %v1281
    %1729 = vmatprep.subr.bf16.mxu0 %v1290
    %1730 = vmatpush1.bf16.msra.mxu0 %v1289
    %1731 = vmatprep.subr.bf16.mxu0 %v1298
    %1732 = vmatpush1.bf16.msra.mxu0 %v1297
    %1733 = vmatprep.subr.bf16.mxu0 %v1306
    %1734 = vmatpush1.bf16.msra.mxu0 %v1305
    %1735 = vmatprep.subr.bf16.mxu0 %v1314
    %1736 = vmatpush1.bf16.msra.mxu0 %v1313
    %1737 = vmatprep.mubr.bf16.mxu0 %v124
    %1738 = vmatmul.mubr.bf16.gmra.mrb[0].mxu0 %v123
    %v1739 = vpop.f32.mrb[0].mxu0
    %v1740 = vadd.f32 %v388, %v1739
    %v1741 = vpop.f32.mrb[0].mxu0
    %v1742 = vadd.f32 %v392, %v1741
    %v1743 = vpop.f32.mrb[0].mxu0
    %v1744 = vpop.f32.mrb[0].mxu0
    %1745 = vdwg.mxu0
    %1746 = vmatprep.subr.bf16.mxu0 %v1322
    %1747 = vmatpush1.bf16.msra.mxu0 %v1321
    %1748 = vmatprep.subr.bf16.mxu0 %v1330
    %1749 = vmatpush1.bf16.msra.mxu0 %v1329
    %1750 = vmatprep.subr.bf16.mxu0 %v1338
    %1751 = vmatpush1.bf16.msra.mxu0 %v1337
    %1752 = vmatprep.subr.bf16.mxu0 %v1346
    %1753 = vmatpush1.bf16.msra.mxu0 %v1345
    %1754 = vmatprep.subr.bf16.mxu0 %v1354
    %1755 = vmatpush1.bf16.msra.mxu0 %v1353
    %1756 = vmatprep.subr.bf16.mxu0 %v1362
    %1757 = vmatpush1.bf16.msra.mxu0 %v1361
    %1758 = vmatprep.subr.bf16.mxu0 %v1370
    %1759 = vmatpush1.bf16.msra.mxu0 %v1369
    %1760 = vmatprep.subr.bf16.mxu0 %v1378
    %1761 = vmatpush1.bf16.msra.mxu0 %v1377
    %1762 = vmatprep.subr.bf16.mxu0 %v1386
    %1763 = vmatpush1.bf16.msra.mxu0 %v1385
    %1764 = vmatprep.subr.bf16.mxu0 %v1394
    %1765 = vmatpush1.bf16.msra.mxu0 %v1393
    %1766 = vmatprep.subr.bf16.mxu0 %v1402
    %1767 = vmatpush1.bf16.msra.mxu0 %v1401
    %1768 = vmatprep.subr.bf16.mxu0 %v1410
    %1769 = vmatpush1.bf16.msra.mxu0 %v1409
    %1770 = vmatprep.subr.bf16.mxu0 %v1418
    %1771 = vmatpush1.bf16.msra.mxu0 %v1417
    %1772 = vmatprep.subr.bf16.mxu0 %v1426
    %1773 = vmatpush1.bf16.msra.mxu0 %v1425
    %1774 = vmatprep.subr.bf16.mxu0 %v1434
    %1775 = vmatpush1.bf16.msra.mxu0 %v1433
    %1776 = vmatprep.subr.bf16.mxu0 %v1442
    %1777 = vmatpush1.bf16.msra.mxu0 %v1441
    %1778 = vmatprep.mubr.bf16.mxu0 %v126
    %1779 = vmatmul.mubr.bf16.gmra.mrb[0].mxu0 %v125
    %v1780 = vpop.f32.mrb[0].mxu0
    %v1781 = vadd.f32 %v1740, %v1780
    %v1782 = vpop.f32.mrb[0].mxu0
    %v1783 = vadd.f32 %v1742, %v1782
    %v1784 = vpop.f32.mrb[0].mxu0
    %v1785 = vpop.f32.mrb[0].mxu0
    %1786 = vdwg.mxu0
    %1787 = vmatprep.subr.bf16.mxu0 %v1196
    %1788 = vmatpush1.bf16.msra.mxu0 %v1195
    %1789 = vmatprep.subr.bf16.mxu0 %v1204
    %1790 = vmatpush1.bf16.msra.mxu0 %v1203
    %1791 = vmatprep.subr.bf16.mxu0 %v1212
    %1792 = vmatpush1.bf16.msra.mxu0 %v1211
    %1793 = vmatprep.subr.bf16.mxu0 %v1220
    %1794 = vmatpush1.bf16.msra.mxu0 %v1219
    %1795 = vmatprep.subr.bf16.mxu0 %v1228
    %1796 = vmatpush1.bf16.msra.mxu0 %v1227
    %1797 = vmatprep.subr.bf16.mxu0 %v1236
    %1798 = vmatpush1.bf16.msra.mxu0 %v1235
    %1799 = vmatprep.subr.bf16.mxu0 %v1244
    %1800 = vmatpush1.bf16.msra.mxu0 %v1243
    %1801 = vmatprep.subr.bf16.mxu0 %v1252
    %1802 = vmatpush1.bf16.msra.mxu0 %v1251
    %1803 = vmatprep.subr.bf16.mxu0 %v1260
    %1804 = vmatpush1.bf16.msra.mxu0 %v1259
    %1805 = vmatprep.subr.bf16.mxu0 %v1268
    %1806 = vmatpush1.bf16.msra.mxu0 %v1267
    %1807 = vmatprep.subr.bf16.mxu0 %v1276
    %1808 = vmatpush1.bf16.msra.mxu0 %v1275
    %1809 = vmatprep.subr.bf16.mxu0 %v1284
    %1810 = vmatpush1.bf16.msra.mxu0 %v1283
    %1811 = vmatprep.subr.bf16.mxu0 %v1292
    %1812 = vmatpush1.bf16.msra.mxu0 %v1291
    %1813 = vmatprep.subr.bf16.mxu0 %v1300
    %1814 = vmatpush1.bf16.msra.mxu0 %v1299
    %1815 = vmatprep.subr.bf16.mxu0 %v1308
    %1816 = vmatpush1.bf16.msra.mxu0 %v1307
    %1817 = vmatprep.subr.bf16.mxu0 %v1316
    %1818 = vmatpush1.bf16.msra.mxu0 %v1315
    %1819 = vmatprep.mubr.bf16.mxu0 %v124
    %1820 = vmatmul.mubr.bf16.gmra.mrb[0].mxu0 %v123
    %v1821 = vpop.f32.mrb[0].mxu0
    %v1822 = vadd.f32 %v396, %v1821
    %v1823 = vpop.f32.mrb[0].mxu0
    %v1824 = vadd.f32 %v400, %v1823
    %v1825 = vpop.f32.mrb[0].mxu0
    %v1826 = vpop.f32.mrb[0].mxu0
    %1827 = vdwg.mxu0
    %1828 = vmatprep.subr.bf16.mxu0 %v1324
    %1829 = vmatpush1.bf16.msra.mxu0 %v1323
    %1830 = vmatprep.subr.bf16.mxu0 %v1332
    %1831 = vmatpush1.bf16.msra.mxu0 %v1331
    %1832 = vmatprep.subr.bf16.mxu0 %v1340
    %1833 = vmatpush1.bf16.msra.mxu0 %v1339
    %1834 = vmatprep.subr.bf16.mxu0 %v1348
    %1835 = vmatpush1.bf16.msra.mxu0 %v1347
    %1836 = vmatprep.subr.bf16.mxu0 %v1356
    %1837 = vmatpush1.bf16.msra.mxu0 %v1355
    %1838 = vmatprep.subr.bf16.mxu0 %v1364
    %1839 = vmatpush1.bf16.msra.mxu0 %v1363
    %1840 = vmatprep.subr.bf16.mxu0 %v1372
    %1841 = vmatpush1.bf16.msra.mxu0 %v1371
    %1842 = vmatprep.subr.bf16.mxu0 %v1380
    %1843 = vmatpush1.bf16.msra.mxu0 %v1379
    %1844 = vmatprep.subr.bf16.mxu0 %v1388
    %1845 = vmatpush1.bf16.msra.mxu0 %v1387
    %1846 = vmatprep.subr.bf16.mxu0 %v1396
    %1847 = vmatpush1.bf16.msra.mxu0 %v1395
    %1848 = vmatprep.subr.bf16.mxu0 %v1404
    %1849 = vmatpush1.bf16.msra.mxu0 %v1403
    %1850 = vmatprep.subr.bf16.mxu0 %v1412
    %1851 = vmatpush1.bf16.msra.mxu0 %v1411
    %1852 = vmatprep.subr.bf16.mxu0 %v1420
    %1853 = vmatpush1.bf16.msra.mxu0 %v1419
    %1854 = vmatprep.subr.bf16.mxu0 %v1428
    %1855 = vmatpush1.bf16.msra.mxu0 %v1427
    %1856 = vmatprep.subr.bf16.mxu0 %v1436
    %1857 = vmatpush1.bf16.msra.mxu0 %v1435
    %1858 = vmatprep.subr.bf16.mxu0 %v1444
    %1859 = vmatpush1.bf16.msra.mxu0 %v1443
    %1860 = vmatprep.mubr.bf16.mxu0 %v126
    %1861 = vmatmul.mubr.bf16.gmra.mrb[0].mxu0 %v125
    %v1862 = vpop.f32.mrb[0].mxu0
    %v1863 = vadd.f32 %v1822, %v1862
    %v1864 = vpop.f32.mrb[0].mxu0
    %v1865 = vadd.f32 %v1824, %v1864
    %v1866 = vpop.f32.mrb[0].mxu0
    %v1867 = vpop.f32.mrb[0].mxu0
    %1868 = vdwg.mxu0
    %1869 = vmatprep.subr.bf16.mxu0 %v1198
    %1870 = vmatpush1.bf16.msra.mxu0 %v1197
    %1871 = vmatprep.subr.bf16.mxu0 %v1206
    %1872 = vmatpush1.bf16.msra.mxu0 %v1205
    %1873 = vmatprep.subr.bf16.mxu0 %v1214
    %1874 = vmatpush1.bf16.msra.mxu0 %v1213
    %1875 = vmatprep.subr.bf16.mxu0 %v1222
    %1876 = vmatpush1.bf16.msra.mxu0 %v1221
    %1877 = vmatprep.subr.bf16.mxu0 %v1230
    %1878 = vmatpush1.bf16.msra.mxu0 %v1229
    %1879 = vmatprep.subr.bf16.mxu0 %v1238
    %1880 = vmatpush1.bf16.msra.mxu0 %v1237
    %1881 = vmatprep.subr.bf16.mxu0 %v1246
    %1882 = vmatpush1.bf16.msra.mxu0 %v1245
    %1883 = vmatprep.subr.bf16.mxu0 %v1254
    %1884 = vmatpush1.bf16.msra.mxu0 %v1253
    %1885 = vmatprep.subr.bf16.mxu0 %v1262
    %1886 = vmatpush1.bf16.msra.mxu0 %v1261
    %1887 = vmatprep.subr.bf16.mxu0 %v1270
    %1888 = vmatpush1.bf16.msra.mxu0 %v1269
    %1889 = vmatprep.subr.bf16.mxu0 %v1278
    %1890 = vmatpush1.bf16.msra.mxu0 %v1277
    %1891 = vmatprep.subr.bf16.mxu0 %v1286
    %1892 = vmatpush1.bf16.msra.mxu0 %v1285
    %1893 = vmatprep.subr.bf16.mxu0 %v1294
    %1894 = vmatpush1.bf16.msra.mxu0 %v1293
    %1895 = vmatprep.subr.bf16.mxu0 %v1302
    %1896 = vmatpush1.bf16.msra.mxu0 %v1301
    %1897 = vmatprep.subr.bf16.mxu0 %v1310
    %1898 = vmatpush1.bf16.msra.mxu0 %v1309
    %1899 = vmatprep.subr.bf16.mxu0 %v1318
    %1900 = vmatpush1.bf16.msra.mxu0 %v1317
    %1901 = vmatprep.mubr.bf16.mxu0 %v124
    %1902 = vmatmul.mubr.bf16.gmra.mrb[0].mxu0 %v123
    %v1903 = vpop.f32.mrb[0].mxu0
    %v1904 = vadd.f32 %v404, %v1903
    %v1905 = vpop.f32.mrb[0].mxu0
    %v1906 = vadd.f32 %v408, %v1905
    %v1907 = vpop.f32.mrb[0].mxu0
    %v1908 = vpop.f32.mrb[0].mxu0
    %1909 = vdwg.mxu0
    %1910 = vmatprep.subr.bf16.mxu0 %v1326
    %1911 = vmatpush1.bf16.msra.mxu0 %v1325
    %1912 = vmatprep.subr.bf16.mxu0 %v1334
    %1913 = vmatpush1.bf16.msra.mxu0 %v1333
    %1914 = vmatprep.subr.bf16.mxu0 %v1342
    %1915 = vmatpush1.bf16.msra.mxu0 %v1341
    %1916 = vmatprep.subr.bf16.mxu0 %v1350
    %1917 = vmatpush1.bf16.msra.mxu0 %v1349
    %1918 = vmatprep.subr.bf16.mxu0 %v1358
    %1919 = vmatpush1.bf16.msra.mxu0 %v1357
    %1920 = vmatprep.subr.bf16.mxu0 %v1366
    %1921 = vmatpush1.bf16.msra.mxu0 %v1365
    %1922 = vmatprep.subr.bf16.mxu0 %v1374
    %1923 = vmatpush1.bf16.msra.mxu0 %v1373
    %1924 = vmatprep.subr.bf16.mxu0 %v1382
    %1925 = vmatpush1.bf16.msra.mxu0 %v1381
    %1926 = vmatprep.subr.bf16.mxu0 %v1390
    %1927 = vmatpush1.bf16.msra.mxu0 %v1389
    %1928 = vmatprep.subr.bf16.mxu0 %v1398
    %1929 = vmatpush1.bf16.msra.mxu0 %v1397
    %1930 = vmatprep.subr.bf16.mxu0 %v1406
    %1931 = vmatpush1.bf16.msra.mxu0 %v1405
    %1932 = vmatprep.subr.bf16.mxu0 %v1414
    %1933 = vmatpush1.bf16.msra.mxu0 %v1413
    %1934 = vmatprep.subr.bf16.mxu0 %v1422
    %1935 = vmatpush1.bf16.msra.mxu0 %v1421
    %1936 = vmatprep.subr.bf16.mxu0 %v1430
    %1937 = vmatpush1.bf16.msra.mxu0 %v1429
    %1938 = vmatprep.subr.bf16.mxu0 %v1438
    %1939 = vmatpush1.bf16.msra.mxu0 %v1437
    %1940 = vmatprep.subr.bf16.mxu0 %v1446
    %1941 = vmatpush1.bf16.msra.mxu0 %v1445
    %1942 = vmatprep.mubr.bf16.mxu0 %v126
    %1943 = vmatmul.mubr.bf16.gmra.mrb[0].mxu0 %v125
    %v1944 = vpop.f32.mrb[0].mxu0
    %v1945 = vadd.f32 %v1904, %v1944
    %v1946 = vpop.f32.mrb[0].mxu0
    %v1947 = vadd.f32 %v1906, %v1946
    %v1948 = vpop.f32.mrb[0].mxu0
    %v1949 = vpop.f32.mrb[0].mxu0
    %1950 = vdwg.mxu0
    %1951 = vmatprep.subr.bf16.mxu0 %v1200
    %1952 = vmatpush1.bf16.msra.mxu0 %v1199
    %1953 = vmatprep.subr.bf16.mxu0 %v1208
    %1954 = vmatpush1.bf16.msra.mxu0 %v1207
    %1955 = vmatprep.subr.bf16.mxu0 %v1216
    %1956 = vmatpush1.bf16.msra.mxu0 %v1215
    %1957 = vmatprep.subr.bf16.mxu0 %v1224
    %1958 = vmatpush1.bf16.msra.mxu0 %v1223
    %1959 = vmatprep.subr.bf16.mxu0 %v1232
    %1960 = vmatpush1.bf16.msra.mxu0 %v1231
    %1961 = vmatprep.subr.bf16.mxu0 %v1240
    %1962 = vmatpush1.bf16.msra.mxu0 %v1239
    %1963 = vmatprep.subr.bf16.mxu0 %v1248
    %1964 = vmatpush1.bf16.msra.mxu0 %v1247
    %1965 = vmatprep.subr.bf16.mxu0 %v1256
    %1966 = vmatpush1.bf16.msra.mxu0 %v1255
    %1967 = vmatprep.subr.bf16.mxu0 %v1264
    %1968 = vmatpush1.bf16.msra.mxu0 %v1263
    %1969 = vmatprep.subr.bf16.mxu0 %v1272
    %1970 = vmatpush1.bf16.msra.mxu0 %v1271
    %1971 = vmatprep.subr.bf16.mxu0 %v1280
    %1972 = vmatpush1.bf16.msra.mxu0 %v1279
    %1973 = vmatprep.subr.bf16.mxu0 %v1288
    %1974 = vmatpush1.bf16.msra.mxu0 %v1287
    %1975 = vmatprep.subr.bf16.mxu0 %v1296
    %1976 = vmatpush1.bf16.msra.mxu0 %v1295
    %1977 = vmatprep.subr.bf16.mxu0 %v1304
    %1978 = vmatpush1.bf16.msra.mxu0 %v1303
    %1979 = vmatprep.subr.bf16.mxu0 %v1312
    %1980 = vmatpush1.bf16.msra.mxu0 %v1311
    %1981 = vmatprep.subr.bf16.mxu0 %v1320
    %1982 = vmatpush1.bf16.msra.mxu0 %v1319
    %1983 = vmatprep.mubr.bf16.mxu0 %v124
    %1984 = vmatmul.mubr.bf16.gmra.mrb[0].mxu0 %v123
    %v1985 = vpop.f32.mrb[0].mxu0
    %v1986 = vadd.f32 %v412, %v1985
    %v1987 = vpop.f32.mrb[0].mxu0
    %v1988 = vadd.f32 %v416, %v1987
    %v1989 = vpop.f32.mrb[0].mxu0
    %v1990 = vpop.f32.mrb[0].mxu0
    %1991 = vdwg.mxu0
    %1992 = vmatprep.subr.bf16.mxu0 %v1328
    %1993 = vmatpush1.bf16.msra.mxu0 %v1327
    %1994 = vmatprep.subr.bf16.mxu0 %v1336
    %1995 = vmatpush1.bf16.msra.mxu0 %v1335
    %1996 = vmatprep.subr.bf16.mxu0 %v1344
    %1997 = vmatpush1.bf16.msra.mxu0 %v1343
    %1998 = vmatprep.subr.bf16.mxu0 %v1352
    %1999 = vmatpush1.bf16.msra.mxu0 %v1351
    %2000 = vmatprep.subr.bf16.mxu0 %v1360
    %2001 = vmatpush1.bf16.msra.mxu0 %v1359
    %2002 = vmatprep.subr.bf16.mxu0 %v1368
    %2003 = vmatpush1.bf16.msra.mxu0 %v1367
    %2004 = vmatprep.subr.bf16.mxu0 %v1376
    %2005 = vmatpush1.bf16.msra.mxu0 %v1375
    %2006 = vmatprep.subr.bf16.mxu0 %v1384
    %2007 = vmatpush1.bf16.msra.mxu0 %v1383
    %2008 = vmatprep.subr.bf16.mxu0 %v1392
    %2009 = vmatpush1.bf16.msra.mxu0 %v1391
    %2010 = vmatprep.subr.bf16.mxu0 %v1400
    %2011 = vmatpush1.bf16.msra.mxu0 %v1399
    %2012 = vmatprep.subr.bf16.mxu0 %v1408
    %2013 = vmatpush1.bf16.msra.mxu0 %v1407
    %2014 = vmatprep.subr.bf16.mxu0 %v1416
    %2015 = vmatpush1.bf16.msra.mxu0 %v1415
    %2016 = vmatprep.subr.bf16.mxu0 %v1424
    %2017 = vmatpush1.bf16.msra.mxu0 %v1423
    %2018 = vmatprep.subr.bf16.mxu0 %v1432
    %2019 = vmatpush1.bf16.msra.mxu0 %v1431
    %2020 = vmatprep.subr.bf16.mxu0 %v1440
    %2021 = vmatpush1.bf16.msra.mxu0 %v1439
    %2022 = vmatprep.subr.bf16.mxu0 %v1448
    %2023 = vmatpush1.bf16.msra.mxu0 %v1447
    %2024 = vmatprep.mubr.bf16.mxu0 %v126
    %2025 = vmatmul.mubr.bf16.gmra.mrb[0].mxu0 %v125
    %v2026 = vpop.f32.mrb[0].mxu0
    %v2027 = vadd.f32 %v1986, %v2026
    %v2028 = vpop.f32.mrb[0].mxu0
    %v2029 = vadd.f32 %v1988, %v2028
    %v2030 = vpop.f32.mrb[0].mxu0
    %v2031 = vpop.f32.mrb[0].mxu0
    %2032 = vdwg.mxu0
    %vm2033 = vcmp.ge.f32.partialorder %v1781, 0.0
    %vm2034 = vcmp.ge.f32.partialorder %v1783, 0.0
    %vm2035 = vcmp.ge.f32.partialorder %v1863, 0.0
    %vm2036 = vcmp.ge.f32.partialorder %v1865, 0.0
    %vm2037 = vcmp.ge.f32.partialorder %v1945, 0.0
    %vm2038 = vcmp.ge.f32.partialorder %v1947, 0.0
    %vm2039 = vcmp.ge.f32.partialorder %v2027, 0.0
    %vm2040 = vcmp.ge.f32.partialorder %v2029, 0.0
    %v2041 = vmul.f32 %v1781, 0.01
    %v2042 = vmul.f32 %v1783, 0.01
    %v2043 = vmul.f32 %v1863, 0.01
    %v2044 = vmul.f32 %v1865, 0.01
    %v2045 = vmul.f32 %v1945, 0.01
    %v2046 = vmul.f32 %v1947, 0.01
    %v2047 = vmul.f32 %v2027, 0.01
    %v2048 = vmul.f32 %v2029, 0.01
    %v2049 = vsel %vm2033, %v1781, %v2041
    %v2050 = vsel %vm2034, %v1783, %v2042
    %v2051 = vsel %vm2035, %v1863, %v2043
    %v2052 = vsel %vm2036, %v1865, %v2044
    %v2053 = vsel %vm2037, %v1945, %v2045
    %v2054 = vsel %vm2038, %v1947, %v2046
    %v2055 = vsel %vm2039, %v2027, %v2047
    %v2056 = vsel %vm2040, %v2029, %v2048
    %v2057 = vld [vmem:[%s5] sm:$0xff]
    %v2059 = vlaneseq
    %v2060 = vshrl.u32 %v2059, 7
    %v2061 = vsub.s32 0, %v2060
    %v2062 = vrot.slane %v2057, %v2061
    %v2063 = vlaneseq
    %v2064 = vshrl.u32 %v2063, 7
    %v2065 = vsub.s32 1, %v2064
    %v2066 = vrot.slane %v2057, %v2065
    %v2067 = vlaneseq
    %v2068 = vshrl.u32 %v2067, 7
    %v2069 = vsub.s32 2, %v2068
    %v2070 = vrot.slane %v2057, %v2069
    %v2071 = vlaneseq
    %v2072 = vshrl.u32 %v2071, 7
    %v2073 = vsub.s32 3, %v2072
    %v2074 = vrot.slane %v2057, %v2073
    %v2075 = vlaneseq
    %v2076 = vshrl.u32 %v2075, 7
    %v2077 = vsub.s32 4, %v2076
    %v2078 = vrot.slane %v2057, %v2077
    %v2079 = vlaneseq
    %v2080 = vshrl.u32 %v2079, 7
    %v2081 = vsub.s32 5, %v2080
    %v2082 = vrot.slane %v2057, %v2081
    %v2083 = vlaneseq
    %v2084 = vshrl.u32 %v2083, 7
    %v2085 = vsub.s32 6, %v2084
    %v2086 = vrot.slane %v2057, %v2085
    %v2087 = vlaneseq
    %v2088 = vshrl.u32 %v2087, 7
    %v2089 = vsub.s32 7, %v2088
    %v2090 = vrot.slane %v2057, %v2089
    %v2099 = vmul.f32 %v2049, %v2062
    %v2100 = vmul.f32 %v2050, %v2066
    %v2101 = vmul.f32 %v2051, %v2070
    %v2102 = vmul.f32 %v2052, %v2074
    %v2103 = vmul.f32 %v2053, %v2078
    %v2104 = vmul.f32 %v2054, %v2082
    %v2105 = vmul.f32 %v2055, %v2086
    %v2106 = vmul.f32 %v2056, %v2090
    %v2107 = vadd.f32 %v2099, %v2100
    %v2108 = vadd.f32 %v2107, %v2101
    %v2109 = vadd.f32 %v2108, %v2102
    %v2110 = vadd.f32 %v2109, %v2103
    %v2111 = vadd.f32 %v2110, %v2104
    %v2112 = vadd.f32 %v2111, %v2105
    %v2113 = vadd.f32 %v2112, %v2106
    %2114 = vadd.xlane.f32.xlu0 %v2113
    %v2115 = vpop.xlane.xlu0 %2114
    %s2116 = sld [smem:[#allocation2]]
    %v2117 = vstv %s2116
    %v2118 = vadd.f32 %v2115, %v2117
    %v2119 = vsub.f32 0.0, %v2118
    %v2120 = vmul.f32 %v2119, 1.442695
    %v2121 = vpow.pop %v2120
    %v2122 = vadd.f32 %v2121, 1.0
    %v2123 = vrcp.pop %v2122
    %v2124 = vmul.f32 1.0, %v2123
    %vm2125 = vcmask 7168
    %2126 = vst.msk [vmem:[%s7] sm:$0xff] %vm2125, %v2124
    // Predicated region
    $region38: #{tpu_custom_call.1} parent=1 // pred_check
      _
    $region39: #{tpu_custom_call.1} parent=1 // pred_check_branch
      %2128 = sbr.rel (0) target = $region41
    $region40: #{tpu_custom_call.1} parent=1 // pred_region
      _
    $region41: #{tpu_custom_call.1} parent=1 // pred_fallthru
      _
    // Predicated region
    $region42: #{tpu_custom_call.1} parent=1 // pred_check
      _
    $region43: #{tpu_custom_call.1} parent=1 // pred_check_branch
      %2130 = sbr.rel (0) target = $region45
    $region44: #{tpu_custom_call.1} parent=1 // pred_region
      _
    $region45: #{tpu_custom_call.1} parent=1 // pred_fallthru
      _
    %2131 = vsyncpa [#allocation4], 1
    %2132 = vsyncpa [#allocation6], 1

</llo_original>
